<compile_context>
chip_gen: v6e
topology: v6e:2x2x1
jax: 0.10.0
libtpu: 0.0.40
codegen_flags: <defaults>
</compile_context>

<pallas_src>
import functools

import jax
import jax.numpy as jnp
from jax import lax
from jax.experimental import pallas as pl
from jax.experimental.pallas import tpu as pltpu


# ------------------------------ tiling helper ------------------------------ #

def _pick_row_tile(num_rows, batch, width, target_m=512):
    """Largest divisor of num_rows giving ~target_m flattened matmul rows per
    grid step while keeping at least 2 grid steps (so the BlockSpec pipeline
    actually overlaps DMA with compute).  At real UNet sizes this keeps the
    per-step VMEM footprint in the few-MiB range (safe for v7x's 64 MiB)."""
    budget = max(1, target_m // max(1, batch * width))
    cap = max(1, num_rows // 2)          # >= 2 grid steps when possible
    limit = min(budget, cap)
    best = 1
    for d in range(1, num_rows + 1):
        if num_rows % d == 0 and d <= limit:
            best = d
    return best


# ----------------------------- Pallas kernels ------------------------------ #

def _downconv_s2_kernel(x_ref, xh_ref, w_ref, o_ref):
    """Stride-2 k=4 conv, expressed as a stride-1 k=2 conv on the
    space-to-depth input.  Patch assembly happens in VMEM only.

    x_ref : (B, TH, Ws, 4*Cin)   row tile of the space-to-depth input
    xh_ref: (B, 1,  Ws, 4*Cin)   one-row halo (row TH of this tile)
    w_ref : (16*Cin, Cout)       resident weight
    o_ref : (B, TH, Wo, Cout)    conv output rows
    """
    b, th, ws, c4 = x_ref.shape
    wo = o_ref.shape[2]
    c1 = o_ref.shape[3]

    x = jnp.concatenate([x_ref[...], xh_ref[...]], axis=1)        # (b, th+1, ws, c4)
    cols = []
    for a in range(2):
        for c in range(2):
            cols.append(x[:, a:a + th, c:c + wo, :])              # shifted 2x2 windows
    patches = jnp.concatenate(cols, axis=-1)                      # (b, th, wo, 4*c4)

    m = patches.reshape(b * th * wo, 4 * c4)                      # one flat MXU matmul
    y = jnp.dot(m, w_ref[...], preferred_element_type=jnp.float32)
    o_ref[...] = y.reshape(b, th, wo, c1).astype(o_ref.dtype)


def _innermost_kernel(x_ref, w_ref, o_ref, q_acc, *, k, ho2, wo2, negative_slope):
    """Fused innermost branch: LeakyReLU -> conv(k=4,s=1,p=1) -> global avg pool,
    using the mean-before-matmul identity.

    Per grid step: reduce a tile of activated feature rows to partial shifted
    window sums q (B, k*k*Cin) in VMEM scratch; at the last step do the single
    (B, K) @ (K, Cout) matmul.
    """
    i = pl.program_id(0)

    @pl.when(i == 0)
    def _():
        q_acc[...] = jnp.zeros_like(q_acc)

    th = x_ref.shape[1]
    w1 = x_ref.shape[2]

    x = x_ref[...].astype(jnp.float32)
    x = jnp.where(x >= 0, x, negative_slope * x)                  # LeakyReLU(0.2)

    # Global (unpadded) row index of each row in this tile.
    grow = i * th + lax.broadcasted_iota(jnp.int32, (1, th, 1, 1), 1)

    parts = []
    for kh in range(k):
        # Padded rows [kh, kh+ho2) -> unpadded rows [kh-1, kh+ho2-2] (pad rows are zero).
        rmask = (grow >= kh - 1) & (grow <= kh + ho2 - 2)
        slab = jnp.sum(jnp.where(rmask, x, 0.0), axis=1)          # (b, w1, c1)
        for kw in range(k):
            clo = max(kw - 1, 0)
            chi = min(kw + wo2 - 1, w1)
            parts.append(jnp.sum(slab[:, clo:chi, :], axis=1))    # (b, c1)
    q_acc[...] += jnp.concatenate(parts, axis=-1)                 # (b, k*k*c1)

    @pl.when(i == pl.num_programs(0) - 1)
    def _():
        q = q_acc[...] * (1.0 / float(ho2 * wo2))                 # true Ho*Wo mean
        o_ref[...] = jnp.dot(q, w_ref[...],
                             preferred_element_type=jnp.float32).astype(o_ref.dtype)


# ------------------------------ Pallas wrappers ----------------------------- #

def downconv_s2_pallas(x_nhwc, w_oihw, *, row_tile=None):
    """Conv2d(kernel=4, stride=2, padding=1, bias=False) on an NHWC input."""
    b, h, w, cin = x_nhwc.shape
    c1, cin_w, kh, kw = w_oihw.shape
    assert (kh, kw) == (4, 4) and cin_w == cin
    assert h % 2 == 0 and w % 2 == 0, "stride-2 UNet downconv expects even spatial dims"
    ho, wo = h // 2, w // 2
    hs, ws = ho + 1, wo + 1

    # Layout plumbing only (same #bytes as x): zero-pad + 2x2 space-to-depth.
    xp = jnp.pad(x_nhwc, ((0, 0), (1, 1), (1, 1), (0, 0)))
    x_s2d = (xp.reshape(b, hs, 2, ws, 2, cin)
               .transpose(0, 1, 3, 2, 4, 5)
               .reshape(b, hs, ws, 4 * cin))

    # Weight -> (16*Cin, Cout) matching the in-kernel (a, c, ph, pw, ci) patch order,
    # where original kernel index kh = 2a+ph, kw = 2c+pw.
    wr = w_oihw.reshape(c1, cin, 2, 2, 2, 2)                      # (co, ci, a, ph, c, pw)
    w_mat = jnp.transpose(wr, (2, 4, 3, 5, 1, 0)).reshape(16 * cin, c1)

    th = _pick_row_tile(ho, b, wo) if row_tile is None else row_tile
    assert ho % th == 0
    grid = (ho // th,)

    return pl.pallas_call(
        _downconv_s2_kernel,
        out_shape=jax.ShapeDtypeStruct((b, ho, wo, c1), x_nhwc.dtype),
        grid=grid,
        in_specs=[
            pl.BlockSpec((b, th, ws, 4 * cin), lambda i: (0, i, 0, 0)),            # row tile
            pl.BlockSpec((b, 1, ws, 4 * cin), lambda i: (0, (i + 1) * th, 0, 0)),  # 1-row halo
            pl.BlockSpec((16 * cin, c1), lambda i: (0, 0)),                        # resident weight
        ],
        out_specs=pl.BlockSpec((b, th, wo, c1), lambda i: (0, i, 0, 0)),
        compiler_params=pltpu.CompilerParams(dimension_semantics=("parallel",)),
    )(x_s2d, x_s2d, w_mat)


def innermost_forward_pallas(x_nhwc, w_oihw, *, negative_slope=0.2, row_tile=None):
    """Innermost branch: LeakyReLU -> Conv2d(k=4,s=1,p=1,bias=False) -> avgpool -> view."""
    b, h1, w1, c1 = x_nhwc.shape
    c2, c1_w, k, k2 = w_oihw.shape
    assert c1_w == c1 and k == k2 == 4
    ho2, wo2 = h1 + 2 - k + 1, w1 + 2 - k + 1                     # pad=1, stride=1
    assert ho2 >= 1 and wo2 >= 1

    w_mat = jnp.transpose(w_oihw, (2, 3, 1, 0)).reshape(k * k * c1, c2)

    th = _pick_row_tile(h1, b, w1) if row_tile is None else row_tile
    assert h1 % th == 0
    grid = (h1 // th,)

    kern = functools.partial(_innermost_kernel, k=k, ho2=ho2, wo2=wo2,
                             negative_slope=negative_slope)
    return pl.pallas_call(
        kern,
        out_shape=jax.ShapeDtypeStruct((b, c2), x_nhwc.dtype),
        grid=grid,
        in_specs=[
            pl.BlockSpec((b, th, w1, c1), lambda i: (0, i, 0, 0)),   # streamed feature rows
            pl.BlockSpec((k * k * c1, c2), lambda i: (0, 0)),        # resident weight
        ],
        out_specs=pl.BlockSpec((b, c2), lambda i: (0, 0)),           # resident output
        scratch_shapes=[pltpu.VMEM((b, k * k * c1), jnp.float32)],
        compiler_params=pltpu.CompilerParams(dimension_semantics=("arbitrary",)),
    )(x_nhwc, w_mat)


# --------------------------- module-equivalent wrapper ---------------------- #

class UnetSkipConnectionBlockPallas:
    """JAX/Pallas equivalent of the PyTorch UnetSkipConnectionBlock forward.

    Default norm_layer=BatchNorm2d => use_bias=False on the conv layers
    (matching the PyTorch __init__).  Public interface is NCHW like PyTorch;
    intermediate results are passed between blocks in NHWC to avoid layout
    round-trips.
    """

    def __init__(self, outer_nc, inner_nc, input_nc=None, submodule=None,
                 outermost=False, innermost=False, embedding_dim=128,
                 n_layer=3, key=None):
        self.outermost = outermost
        self.innermost = innermost
        self.submodule = submodule
        self.n_layer = n_layer
        if input_nc is None:
            input_nc = outer_nc
        self.input_nc = input_nc
        self.inner_nc = inner_nc

        key = jax.random.PRNGKey(0) if key is None else key
        kd, _ = jax.random.split(key)
        # Deterministic synthetic init, N(0, 0.02) a la pix2pix.
        if outermost:
            # down = [downconv]  (Conv2d k=4, s=2, p=1, bias=False)
            self.w_downconv = 0.02 * jax.random.normal(
                kd, (inner_nc, input_nc, 4, 4), dtype=jnp.float32)
        else:
            # down uses downconv1 (Conv2d k=4, s=1, p=1, bias=False)
            self.w_downconv1 = 0.02 * jax.random.normal(
                kd, (inner_nc, input_nc, 4, 4), dtype=jnp.float32)
        # TODO(synk): the up path (ReLU -> ConvTranspose2d -> Tanh/BatchNorm, optional
        # Dropout) and the intermediate-branch BatchNorm are only reached when style
        # is not None / for non-leaf middle blocks; not exercised by this forward.

    def __call__(self, x, style=None, count=0, data_format="NCHW"):
        x_nhwc = jnp.transpose(x, (0, 2, 3, 1)) if data_format == "NCHW" else x
        if self.innermost:
            # encode = avgpool(downconv1(leakyrelu(x))).view(B, -1)
            return innermost_forward_pallas(x_nhwc, self.w_downconv1,
                                            negative_slope=0.2)
        elif self.outermost:
            count = count + 1
            enc = downconv_s2_pallas(x_nhwc, self.w_downconv)     # down = [downconv]
            if style is None:
                # pass NHWC straight through (no NCHW round trip between blocks)
                return self.submodule(enc, count=count, data_format="NHWC")
            raise NotImplementedError(
                "style branch requires the up (ConvTranspose) path")  # TODO(synk)
        else:
            raise NotImplementedError(
                "intermediate branch (BatchNorm down path) not instantiated")  # TODO(synk)


# ------------------------------ reference (JAX) ----------------------------- #

def _ref_forward(x_nchw, w_down, w_down1):
    """Pure-JAX reference of outermost(style=None) -> innermost forward."""
    x = jnp.transpose(x_nchw, (0, 2, 3, 1))

    def conv(a, w, stride):
        w_hwio = jnp.transpose(w, (2, 3, 1, 0))
        return lax.conv_general_dilated(
            a, w_hwio, (stride, stride), [(1, 1), (1, 1)],
            dimension_numbers=("NHWC", "HWIO", "NHWC"))

    enc = conv(x, w_down, 2)
    act = jnp.where(enc >= 0, enc, 0.2 * enc)
    y = conv(act, w_down1, 1)
    return jnp.mean(y, axis=(1, 2))


# ----------------------------------- main ----------------------------------- #

if __name__ == "__main__":
    key = jax.random.PRNGKey(0)
    kx, k_inner, k_outer = jax.random.split(key, 3)

    # NCHW input, like PyTorch: batch=2, channels=4, 16x16 spatial.
    x = jax.random.normal(kx, (2, 4, 16, 16), dtype=jnp.float32)

    inner_block = UnetSkipConnectionBlockPallas(
        outer_nc=16, inner_nc=32, input_nc=None, innermost=True, key=k_inner)
    outer_block = UnetSkipConnectionBlockPallas(
        outer_nc=8, inner_nc=16, input_nc=4, submodule=inner_block,
        outermost=True, key=k_outer)

    fwd = jax.jit(lambda a: outer_block(a))       # forward(x, style=None, count=0)
    out = jax.block_until_ready(fwd(x))           # -> (B, inner_nc of innermost)

    ref = jax.block_until_ready(
        _ref_forward(x, outer_block.w_downconv, inner_block.w_downconv1))

    assert out.shape == (2, 32), out.shape
    max_err = float(jnp.max(jnp.abs(out - ref)))
    assert jnp.allclose(out, ref, atol=1e-4, rtol=1e-4), max_err
    print("KERNEL_OK")
</pallas_src>

<mosaic_0001>
module attributes {stable_mosaic.version = 11 : i64} {
  func.func @_downconv_s2_kernel(%arg0: i32, %arg1: memref<2x4x9x16xf32, #tpu.memory_space<vmem>>, %arg2: memref<2x1x9x16xf32, #tpu.memory_space<vmem>>, %arg3: memref<64x16xf32, #tpu.memory_space<vmem>>, %arg4: memref<2x4x8x16xf32, #tpu.memory_space<vmem>>) attributes {dimension_semantics = [#tpu.dimension_semantics<parallel>], iteration_bounds = array<i64: 2>, scalar_prefetch = 0 : i64, scratch_operands = 0 : i64, tpu.core_type = #tpu.core_type<tc>, window_params = [{transform_indices = @transform_0, window_bounds = array<i64: 2, 4, 9, 16>}, {transform_indices = @transform_1, window_bounds = array<i64: 2, 1, 9, 16>}, {pipeline_mode = #tpu.pipeline_mode<synchronous>, transform_indices = @transform_2, window_bounds = array<i64: 64, 16>}, {transform_indices = @transform_3, window_bounds = array<i64: 2, 4, 8, 16>}]} {
    %c0 = arith.constant 0 : index
    %c0_0 = arith.constant 0 : index
    %c0_1 = arith.constant 0 : index
    %c0_2 = arith.constant 0 : index
    %0 = vector.load %arg1[%c0, %c0_0, %c0_1, %c0_2] : memref<2x4x9x16xf32, #tpu.memory_space<vmem>>, vector<2x4x9x16xf32>
    %c0_3 = arith.constant 0 : index
    %c0_4 = arith.constant 0 : index
    %c0_5 = arith.constant 0 : index
    %c0_6 = arith.constant 0 : index
    %1 = vector.load %arg2[%c0_3, %c0_4, %c0_5, %c0_6] : memref<2x1x9x16xf32, #tpu.memory_space<vmem>>, vector<2x1x9x16xf32>
    %2 = tpu.concatenate %0, %1 in 1 : vector<2x4x9x16xf32>, vector<2x1x9x16xf32> -> vector<2x5x9x16xf32>
    %3 = vector.extract_strided_slice %2 {offsets = [0, 0, 0, 0], sizes = [2, 4, 8, 16], strides = [1, 1, 1, 1]} : vector<2x5x9x16xf32> to vector<2x4x8x16xf32>
    %4 = vector.extract_strided_slice %2 {offsets = [0, 0, 1, 0], sizes = [2, 4, 8, 16], strides = [1, 1, 1, 1]} : vector<2x5x9x16xf32> to vector<2x4x8x16xf32>
    %5 = vector.extract_strided_slice %2 {offsets = [0, 1, 0, 0], sizes = [2, 4, 8, 16], strides = [1, 1, 1, 1]} : vector<2x5x9x16xf32> to vector<2x4x8x16xf32>
    %6 = vector.extract_strided_slice %2 {offsets = [0, 1, 1, 0], sizes = [2, 4, 8, 16], strides = [1, 1, 1, 1]} : vector<2x5x9x16xf32> to vector<2x4x8x16xf32>
    %7 = tpu.concatenate %3, %4, %5, %6 in 3 : vector<2x4x8x16xf32>, vector<2x4x8x16xf32>, vector<2x4x8x16xf32>, vector<2x4x8x16xf32> -> vector<2x4x8x64xf32>
    %8 = vector.shape_cast %7 : vector<2x4x8x64xf32> to vector<64x64xf32>
    %c0_7 = arith.constant 0 : index
    %c0_8 = arith.constant 0 : index
    %9 = vector.load %arg3[%c0_7, %c0_8] : memref<64x16xf32, #tpu.memory_space<vmem>>, vector<64x16xf32>
    %cst = arith.constant dense<0.000000e+00> : vector<64x16xf32>
    %10 = tpu.matmul %8, %9, %cst {dimension_numbers = #tpu.dot_dimension_numbers<[1], [0], [0], [1], [0, 0, 1, 1], [], []>} : vector<64x64xf32>, vector<64x16xf32>, vector<64x16xf32> -> vector<64x16xf32>
    %11 = vector.shape_cast %10 : vector<64x16xf32> to vector<2x4x8x16xf32>
    %c0_9 = arith.constant 0 : index
    %c0_10 = arith.constant 0 : index
    %c0_11 = arith.constant 0 : index
    %c0_12 = arith.constant 0 : index
    %12 = vector.load %arg4[%c0_9, %c0_10, %c0_11, %c0_12] : memref<2x4x8x16xf32, #tpu.memory_space<vmem>>, vector<2x4x8x16xf32>
    tpu.vector_store %arg4[%c0_9, %c0_10, %c0_11, %c0_12], %11 {strides = array<i32>} : memref<2x4x8x16xf32, #tpu.memory_space<vmem>>, vector<2x4x8x16xf32>,
    return
  }
  func.func @transform_0(%arg0: i32) -> (i32, i32, i32, i32) {
    %c0_i32 = arith.constant 0 : i32
    %c0_i32_0 = arith.constant 0 : i32
    %c0_i32_1 = arith.constant 0 : i32
    %c0_i32_2 = arith.constant 0 : i32
    return %c0_i32, %arg0, %c0_i32_0, %c0_i32_1 : i32, i32, i32, i32
  }
  func.func @transform_1(%arg0: i32) -> (i32, i32, i32, i32) {
    %c1_i32 = arith.constant 1 : i32
    %0 = arith.addi %arg0, %c1_i32 : i32
    %c4_i32 = arith.constant 4 : i32
    %1 = arith.muli %0, %c4_i32 : i32
    %c0_i32 = arith.constant 0 : i32
    %c0_i32_0 = arith.constant 0 : i32
    %c0_i32_1 = arith.constant 0 : i32
    %c0_i32_2 = arith.constant 0 : i32
    return %c0_i32, %1, %c0_i32_0, %c0_i32_1 : i32, i32, i32, i32
  }
  func.func @transform_2(%arg0: i32) -> (i32, i32) {
    %c0_i32 = arith.constant 0 : i32
    %c0_i32_0 = arith.constant 0 : i32
    %c0_i32_1 = arith.constant 0 : i32
    return %c0_i32, %c0_i32_0 : i32, i32
  }
  func.func @transform_3(%arg0: i32) -> (i32, i32, i32, i32) {
    %c0_i32 = arith.constant 0 : i32
    %c0_i32_0 = arith.constant 0 : i32
    %c0_i32_1 = arith.constant 0 : i32
    %c0_i32_2 = arith.constant 0 : i32
    return %c0_i32, %arg0, %c0_i32_0, %c0_i32_1 : i32, i32, i32, i32
  }
}

module attributes {stable_mosaic.version = 11 : i64} {
  func.func @_innermost_kernel(%arg0: i32, %arg1: memref<2x4x8x16xf32, #tpu.memory_space<vmem>>, %arg2: memref<256x32xf32, #tpu.memory_space<vmem>>, %arg3: memref<2x32xf32, #tpu.memory_space<vmem>>, %arg4: memref<2x256xf32, #tpu.memory_space<vmem>>) attributes {dimension_semantics = [#tpu.dimension_semantics<arbitrary>], iteration_bounds = array<i64: 2>, scalar_prefetch = 0 : i64, scratch_operands = 1 : i64, tpu.core_type = #tpu.core_type<tc>, window_params = [{transform_indices = @transform_0, window_bounds = array<i64: 2, 4, 8, 16>}, {pipeline_mode = #tpu.pipeline_mode<synchronous>, transform_indices = @transform_1, window_bounds = array<i64: 256, 32>}, {pipeline_mode = #tpu.pipeline_mode<synchronous>, transform_indices = @transform_2, window_bounds = array<i64: 2, 32>}]} {
    %c0_i32 = arith.constant 0 : i32
    %0 = arith.cmpi eq, %arg0, %c0_i32 : i32
    %1 = arith.extui %0 : i1 to i32
    %c0_i32_0 = arith.constant 0 : i32
    %2 = arith.cmpi ne, %1, %c0_i32_0 : i32
    scf.if %2 {
      %cst_36 = arith.constant 0.000000e+00 : f32
      %92 = vector.broadcast %cst_36 : f32 to vector<2x256xf32>
      %c0_37 = arith.constant 0 : index
      %c0_38 = arith.constant 0 : index
      %93 = vector.load %arg4[%c0_37, %c0_38] : memref<2x256xf32, #tpu.memory_space<vmem>>, vector<2x256xf32>
      tpu.vector_store %arg4[%c0_37, %c0_38], %92 {strides = array<i32>} : memref<2x256xf32, #tpu.memory_space<vmem>>, vector<2x256xf32>,
    } else {
    }
    %c0 = arith.constant 0 : index
    %c0_1 = arith.constant 0 : index
    %c0_2 = arith.constant 0 : index
    %c0_3 = arith.constant 0 : index
    %3 = vector.load %arg1[%c0, %c0_1, %c0_2, %c0_3] : memref<2x4x8x16xf32, #tpu.memory_space<vmem>>, vector<2x4x8x16xf32>
    %cst = arith.constant 0.000000e+00 : f32
    %4 = vector.broadcast %cst : f32 to vector<2x4x8x16xf32>
    %5 = arith.cmpf oge, %3, %4 : vector<2x4x8x16xf32>
    %cst_4 = arith.constant 2.000000e-01 : f32
    %6 = vector.broadcast %cst_4 : f32 to vector<2x4x8x16xf32>
    %7 = arith.mulf %6, %3 : vector<2x4x8x16xf32>
    %8 = arith.select %5, %3, %7 : vector<2x4x8x16xi1>, vector<2x4x8x16xf32>
    %c4_i32 = arith.constant 4 : i32
    %9 = arith.muli %arg0, %c4_i32 : i32
    %10 = tpu.iota {dimensions = array<i32: 1>} : vector<1x4x1x1xi32>
    %11 = vector.broadcast %9 : i32 to vector<1x4x1x1xi32>
    %12 = arith.addi %11, %10 : vector<1x4x1x1xi32>
    %c-1_i32 = arith.constant -1 : i32
    %13 = vector.broadcast %c-1_i32 : i32 to vector<1x4x1x1xi32>
    %14 = arith.cmpi sge, %12, %13 : vector<1x4x1x1xi32>
    %c5_i32 = arith.constant 5 : i32
    %15 = vector.broadcast %c5_i32 : i32 to vector<1x4x1x1xi32>
    %16 = arith.cmpi sle, %12, %15 : vector<1x4x1x1xi32>
    %17 = arith.andi %14, %16 : vector<1x4x1x1xi1>
    %cst_5 = arith.constant 0.000000e+00 : f32
    %18 = vector.shape_cast %17 : vector<1x4x1x1xi1> to vector<1x4x1x1xi1>
    %19 = vector.broadcast %18 : vector<1x4x1x1xi1> to vector<2x4x8x16xi1>
    %20 = vector.broadcast %cst_5 : f32 to vector<2x4x8x16xf32>
    %21 = arith.select %19, %8, %20 : vector<2x4x8x16xi1>, vector<2x4x8x16xf32>
    %cst_6 = arith.constant dense<0.000000e+00> : vector<2x8x16xf32>
    %22 = vector.multi_reduction <add>, %21, %cst_6 [1] : vector<2x4x8x16xf32> to vector<2x8x16xf32>
    %23 = vector.extract_strided_slice %22 {offsets = [0, 0, 0], sizes = [2, 6, 16], strides = [1, 1, 1]} : vector<2x8x16xf32> to vector<2x6x16xf32>
    %cst_7 = arith.constant dense<0.000000e+00> : vector<2x16xf32>
    %24 = vector.multi_reduction <add>, %23, %cst_7 [1] : vector<2x6x16xf32> to vector<2x16xf32>
    %25 = vector.extract_strided_slice %22 {offsets = [0, 0, 0], sizes = [2, 7, 16], strides = [1, 1, 1]} : vector<2x8x16xf32> to vector<2x7x16xf32>
    %cst_8 = arith.constant dense<0.000000e+00> : vector<2x16xf32>
    %26 = vector.multi_reduction <add>, %25, %cst_8 [1] : vector<2x7x16xf32> to vector<2x16xf32>
    %27 = vector.extract_strided_slice %22 {offsets = [0, 1, 0], sizes = [2, 7, 16], strides = [1, 1, 1]} : vector<2x8x16xf32> to vector<2x7x16xf32>
    %cst_9 = arith.constant dense<0.000000e+00> : vector<2x16xf32>
    %28 = vector.multi_reduction <add>, %27, %cst_9 [1] : vector<2x7x16xf32> to vector<2x16xf32>
    %29 = vector.extract_strided_slice %22 {offsets = [0, 2, 0], sizes = [2, 6, 16], strides = [1, 1, 1]} : vector<2x8x16xf32> to vector<2x6x16xf32>
    %cst_10 = arith.constant dense<0.000000e+00> : vector<2x16xf32>
    %30 = vector.multi_reduction <add>, %29, %cst_10 [1] : vector<2x6x16xf32> to vector<2x16xf32>
    %c0_i32_11 = arith.constant 0 : i32
    %31 = vector.broadcast %c0_i32_11 : i32 to vector<1x4x1x1xi32>
    %32 = arith.cmpi sge, %12, %31 : vector<1x4x1x1xi32>
    %c6_i32 = arith.constant 6 : i32
    %33 = vector.broadcast %c6_i32 : i32 to vector<1x4x1x1xi32>
    %34 = arith.cmpi sle, %12, %33 : vector<1x4x1x1xi32>
    %35 = arith.andi %32, %34 : vector<1x4x1x1xi1>
    %cst_12 = arith.constant 0.000000e+00 : f32
    %36 = vector.shape_cast %35 : vector<1x4x1x1xi1> to vector<1x4x1x1xi1>
    %37 = vector.broadcast %36 : vector<1x4x1x1xi1> to vector<2x4x8x16xi1>
    %38 = vector.broadcast %cst_12 : f32 to vector<2x4x8x16xf32>
    %39 = arith.select %37, %8, %38 : vector<2x4x8x16xi1>, vector<2x4x8x16xf32>
    %cst_13 = arith.constant dense<0.000000e+00> : vector<2x8x16xf32>
    %40 = vector.multi_reduction <add>, %39, %cst_13 [1] : vector<2x4x8x16xf32> to vector<2x8x16xf32>
    %41 = vector.extract_strided_slice %40 {offsets = [0, 0, 0], sizes = [2, 6, 16], strides = [1, 1, 1]} : vector<2x8x16xf32> to vector<2x6x16xf32>
    %cst_14 = arith.constant dense<0.000000e+00> : vector<2x16xf32>
    %42 = vector.multi_reduction <add>, %41, %cst_14 [1] : vector<2x6x16xf32> to vector<2x16xf32>
    %43 = vector.extract_strided_slice %40 {offsets = [0, 0, 0], sizes = [2, 7, 16], strides = [1, 1, 1]} : vector<2x8x16xf32> to vector<2x7x16xf32>
    %cst_15 = arith.constant dense<0.000000e+00> : vector<2x16xf32>
    %44 = vector.multi_reduction <add>, %43, %cst_15 [1] : vector<2x7x16xf32> to vector<2x16xf32>
    %45 = vector.extract_strided_slice %40 {offsets = [0, 1, 0], sizes = [2, 7, 16], strides = [1, 1, 1]} : vector<2x8x16xf32> to vector<2x7x16xf32>
    %cst_16 = arith.constant dense<0.000000e+00> : vector<2x16xf32>
    %46 = vector.multi_reduction <add>, %45, %cst_16 [1] : vector<2x7x16xf32> to vector<2x16xf32>
    %47 = vector.extract_strided_slice %40 {offsets = [0, 2, 0], sizes = [2, 6, 16], strides = [1, 1, 1]} : vector<2x8x16xf32> to vector<2x6x16xf32>
    %cst_17 = arith.constant dense<0.000000e+00> : vector<2x16xf32>
    %48 = vector.multi_reduction <add>, %47, %cst_17 [1] : vector<2x6x16xf32> to vector<2x16xf32>
    %c1_i32 = arith.constant 1 : i32
    %49 = vector.broadcast %c1_i32 : i32 to vector<1x4x1x1xi32>
    %50 = arith.cmpi sge, %12, %49 : vector<1x4x1x1xi32>
    %c7_i32 = arith.constant 7 : i32
    %51 = vector.broadcast %c7_i32 : i32 to vector<1x4x1x1xi32>
    %52 = arith.cmpi sle, %12, %51 : vector<1x4x1x1xi32>
    %53 = arith.andi %50, %52 : vector<1x4x1x1xi1>
    %cst_18 = arith.constant 0.000000e+00 : f32
    %54 = vector.shape_cast %53 : vector<1x4x1x1xi1> to vector<1x4x1x1xi1>
    %55 = vector.broadcast %54 : vector<1x4x1x1xi1> to vector<2x4x8x16xi1>
    %56 = vector.broadcast %cst_18 : f32 to vector<2x4x8x16xf32>
    %57 = arith.select %55, %8, %56 : vector<2x4x8x16xi1>, vector<2x4x8x16xf32>
    %cst_19 = arith.constant dense<0.000000e+00> : vector<2x8x16xf32>
    %58 = vector.multi_reduction <add>, %57, %cst_19 [1] : vector<2x4x8x16xf32> to vector<2x8x16xf32>
    %59 = vector.extract_strided_slice %58 {offsets = [0, 0, 0], sizes = [2, 6, 16], strides = [1, 1, 1]} : vector<2x8x16xf32> to vector<2x6x16xf32>
    %cst_20 = arith.constant dense<0.000000e+00> : vector<2x16xf32>
    %60 = vector.multi_reduction <add>, %59, %cst_20 [1] : vector<2x6x16xf32> to vector<2x16xf32>
    %61 = vector.extract_strided_slice %58 {offsets = [0, 0, 0], sizes = [2, 7, 16], strides = [1, 1, 1]} : vector<2x8x16xf32> to vector<2x7x16xf32>
    %cst_21 = arith.constant dense<0.000000e+00> : vector<2x16xf32>
    %62 = vector.multi_reduction <add>, %61, %cst_21 [1] : vector<2x7x16xf32> to vector<2x16xf32>
    %63 = vector.extract_strided_slice %58 {offsets = [0, 1, 0], sizes = [2, 7, 16], strides = [1, 1, 1]} : vector<2x8x16xf32> to vector<2x7x16xf32>
    %cst_22 = arith.constant dense<0.000000e+00> : vector<2x16xf32>
    %64 = vector.multi_reduction <add>, %63, %cst_22 [1] : vector<2x7x16xf32> to vector<2x16xf32>
    %65 = vector.extract_strided_slice %58 {offsets = [0, 2, 0], sizes = [2, 6, 16], strides = [1, 1, 1]} : vector<2x8x16xf32> to vector<2x6x16xf32>
    %cst_23 = arith.constant dense<0.000000e+00> : vector<2x16xf32>
    %66 = vector.multi_reduction <add>, %65, %cst_23 [1] : vector<2x6x16xf32> to vector<2x16xf32>
    %c2_i32 = arith.constant 2 : i32
    %67 = vector.broadcast %c2_i32 : i32 to vector<1x4x1x1xi32>
    %68 = arith.cmpi sge, %12, %67 : vector<1x4x1x1xi32>
    %c8_i32 = arith.constant 8 : i32
    %69 = vector.broadcast %c8_i32 : i32 to vector<1x4x1x1xi32>
    %70 = arith.cmpi sle, %12, %69 : vector<1x4x1x1xi32>
    %71 = arith.andi %68, %70 : vector<1x4x1x1xi1>
    %cst_24 = arith.constant 0.000000e+00 : f32
    %72 = vector.shape_cast %71 : vector<1x4x1x1xi1> to vector<1x4x1x1xi1>
    %73 = vector.broadcast %72 : vector<1x4x1x1xi1> to vector<2x4x8x16xi1>
    %74 = vector.broadcast %cst_24 : f32 to vector<2x4x8x16xf32>
    %75 = arith.select %73, %8, %74 : vector<2x4x8x16xi1>, vector<2x4x8x16xf32>
    %cst_25 = arith.constant dense<0.000000e+00> : vector<2x8x16xf32>
    %76 = vector.multi_reduction <add>, %75, %cst_25 [1] : vector<2x4x8x16xf32> to vector<2x8x16xf32>
    %77 = vector.extract_strided_slice %76 {offsets = [0, 0, 0], sizes = [2, 6, 16], strides = [1, 1, 1]} : vector<2x8x16xf32> to vector<2x6x16xf32>
    %cst_26 = arith.constant dense<0.000000e+00> : vector<2x16xf32>
    %78 = vector.multi_reduction <add>, %77, %cst_26 [1] : vector<2x6x16xf32> to vector<2x16xf32>
    %79 = vector.extract_strided_slice %76 {offsets = [0, 0, 0], sizes = [2, 7, 16], strides = [1, 1, 1]} : vector<2x8x16xf32> to vector<2x7x16xf32>
    %cst_27 = arith.constant dense<0.000000e+00> : vector<2x16xf32>
    %80 = vector.multi_reduction <add>, %79, %cst_27 [1] : vector<2x7x16xf32> to vector<2x16xf32>
    %81 = vector.extract_strided_slice %76 {offsets = [0, 1, 0], sizes = [2, 7, 16], strides = [1, 1, 1]} : vector<2x8x16xf32> to vector<2x7x16xf32>
    %cst_28 = arith.constant dense<0.000000e+00> : vector<2x16xf32>
    %82 = vector.multi_reduction <add>, %81, %cst_28 [1] : vector<2x7x16xf32> to vector<2x16xf32>
    %83 = vector.extract_strided_slice %76 {offsets = [0, 2, 0], sizes = [2, 6, 16], strides = [1, 1, 1]} : vector<2x8x16xf32> to vector<2x6x16xf32>
    %cst_29 = arith.constant dense<0.000000e+00> : vector<2x16xf32>
    %84 = vector.multi_reduction <add>, %83, %cst_29 [1] : vector<2x6x16xf32> to vector<2x16xf32>
    %c0_30 = arith.constant 0 : index
    %c0_31 = arith.constant 0 : index
    %85 = vector.load %arg4[%c0_30, %c0_31] : memref<2x256xf32, #tpu.memory_space<vmem>>, vector<2x256xf32>
    %86 = tpu.concatenate %24, %26, %28, %30, %42, %44, %46, %48, %60, %62, %64, %66, %78, %80, %82, %84 in 1 : vector<2x16xf32>, vector<2x16xf32>, vector<2x16xf32>, vector<2x16xf32>, vector<2x16xf32>, vector<2x16xf32>, vector<2x16xf32>, vector<2x16xf32>, vector<2x16xf32>, vector<2x16xf32>, vector<2x16xf32>, vector<2x16xf32>, vector<2x16xf32>, vector<2x16xf32>, vector<2x16xf32>, vector<2x16xf32> -> vector<2x256xf32>
    %87 = arith.addf %85, %86 : vector<2x256xf32>
    %c0_32 = arith.constant 0 : index
    %c0_33 = arith.constant 0 : index
    %88 = vector.load %arg4[%c0_32, %c0_33] : memref<2x256xf32, #tpu.memory_space<vmem>>, vector<2x256xf32>
    tpu.vector_store %arg4[%c0_32, %c0_33], %87 {strides = array<i32>} : memref<2x256xf32, #tpu.memory_space<vmem>>, vector<2x256xf32>,
    %c1_i32_34 = arith.constant 1 : i32
    %89 = arith.cmpi eq, %arg0, %c1_i32_34 : i32
    %90 = arith.extui %89 : i1 to i32
    %c0_i32_35 = arith.constant 0 : i32
    %91 = arith.cmpi ne, %90, %c0_i32_35 : i32
    scf.if %91 {
      %c0_36 = arith.constant 0 : index
      %c0_37 = arith.constant 0 : index
      %92 = vector.load %arg4[%c0_36, %c0_37] : memref<2x256xf32, #tpu.memory_space<vmem>>, vector<2x256xf32>
      %cst_38 = arith.constant 0.0204081628 : f32
      %93 = vector.broadcast %cst_38 : f32 to vector<2x256xf32>
      %94 = arith.mulf %92, %93 : vector<2x256xf32>
      %c0_39 = arith.constant 0 : index
      %c0_40 = arith.constant 0 : index
      %95 = vector.load %arg2[%c0_39, %c0_40] : memref<256x32xf32, #tpu.memory_space<vmem>>, vector<256x32xf32>
      %cst_41 = arith.constant dense<0.000000e+00> : vector<2x32xf32>
      %96 = tpu.matmul %94, %95, %cst_41 {dimension_numbers = #tpu.dot_dimension_numbers<[1], [0], [0], [1], [0, 0, 1, 1], [], []>} : vector<2x256xf32>, vector<256x32xf32>, vector<2x32xf32> -> vector<2x32xf32>
      %c0_42 = arith.constant 0 : index
      %c0_43 = arith.constant 0 : index
      %97 = vector.load %arg3[%c0_42, %c0_43] : memref<2x32xf32, #tpu.memory_space<vmem>>, vector<2x32xf32>
      tpu.vector_store %arg3[%c0_42, %c0_43], %96 {strides = array<i32>} : memref<2x32xf32, #tpu.memory_space<vmem>>, vector<2x32xf32>,
    } else {
    }
    return
  }
  func.func @transform_0(%arg0: i32) -> (i32, i32, i32, i32) {
    %c0_i32 = arith.constant 0 : i32
    %c0_i32_0 = arith.constant 0 : i32
    %c0_i32_1 = arith.constant 0 : i32
    %c0_i32_2 = arith.constant 0 : i32
    return %c0_i32, %arg0, %c0_i32_0, %c0_i32_1 : i32, i32, i32, i32
  }
  func.func @transform_1(%arg0: i32) -> (i32, i32) {
    %c0_i32 = arith.constant 0 : i32
    %c0_i32_0 = arith.constant 0 : i32
    %c0_i32_1 = arith.constant 0 : i32
    return %c0_i32, %c0_i32_0 : i32, i32
  }
  func.func @transform_2(%arg0: i32) -> (i32, i32) {
    %c0_i32 = arith.constant 0 : i32
    %c0_i32_0 = arith.constant 0 : i32
    %c0_i32_1 = arith.constant 0 : i32
    return %c0_i32, %c0_i32_0 : i32, i32
  }
}

</mosaic_0001>

<llo_original>
// kernel: _lambda_.2
$region0: #{_lambda_.2}
  #allocation0 [shape = 'u32[]', space=smem, size = 0x4, offset = 0x4, fixed_abs, tag = 'smem constant byte address 0x4 - core index']
  #allocation1 [shape = 'u32[144,128]{1,0:T(1,128)}', space=vmem, size = 0x12000, scoped, tag = 'internal scratch']
  %s0 = inlined_call_operand.vmem [shape: f32[2,9,9,16], index: 0, kind: input, shape index: {}, may-alias: {0,1}]
  %s1 = inlined_call_operand.vmem [shape: f32[2,9,9,16], index: 1, kind: input, shape index: {}, may-alias: {0,1}]
  %s2 = inlined_call_operand.vmem [shape: f32[64,16], index: 2, kind: input, shape index: {}]
  %s3 = inlined_call_operand.vmem [shape: f32[2,8,8,16], index: 3, kind: output, shape index: {}]
  %s4 = sld [smem:[#allocation0]]
  $region169: #{_lambda_.2} parent=0
    _
  %s6 = ssub.s32 1, %s4
  %s7 = scalar_select 0, %s6, %s4
  $region1: #{_lambda_.2} parent=0
    #allocation2 [shape = 'u8[131072]{0}', space=vmem, size = 0x20000, scoped, tag = 'input window, operand 0']
    #allocation3 [shape = 'u8[32768]{0}', space=vmem, size = 0x8000, scoped, tag = 'input window, operand 1']
    #allocation4 [shape = 'u8[65536]{0}', space=vmem, size = 0x10000, scoped, tag = 'output window, operand 0']
    loop: start=0, step=1, limit=4
    $region2: #{_lambda_.2} parent=1 // loop_pre_header
      _
    $region3: #{_lambda_.2} parent=1 // loop_header
      %s9 = sphi 0, %s13
      %p10 = scmp.ge.s32.totalorder %s9, 4
      %s19 = sphi 0, %s21
      %s22 = sphi 0, %s19
      %s23 = sphi 0, %s22
      %s39 = sphi 0, %s23
      %s49 = sphi 0, %s51
      %s52 = sphi 0, %s49
      %s53 = sphi 0, %s52
      %s69 = sphi 0, %s53
      %s73 = sphi 0, %s73
      %s75 = sphi 0, %s73
      %s76 = sphi 0, %s75
      %s90 = sphi 0, %s76
      %s96 = sphi 0, %s98
      %s99 = sphi 0, %s96
      %s100 = sphi 0, %s99
      %s116 = sphi 0, %s100
    $region4: #{_lambda_.2} parent=1 // loop_header_branch
      %12 = sbr.rel (%p10) target = $region8
    $region5: #{_lambda_.2} parent=1 // loop_body
      %s14 = ssub.s32 %s9, 1
      %s15 = ssub.s32 %s9, 2
      %s16 = sadd.s32 %s9, 1
      %s17 = ssub.s32 %s9, %s16
      %p18 = scmp.eq.s32.totalorder %s17, 0
      %s20 = sadd.s32 %s19, 1
      %s21 = scalar_select %p18, %s19, %s20
      %p24 = pneg %p18
      %p25 = scmp.eq.s32.totalorder %s9, 1
      %p26 = por %p24, %p25
      %p27 = scmp.ne.s32.totalorder %s19, %s22
      %p28 = scmp.eq.s32.totalorder %s9, 0
      %p29 = por %p27, %p28
      %p30 = scmp.ne.s32.totalorder %s19, %s22
      %p31 = scmp.eq.s32.totalorder %s14, 1
      %p32 = por %p30, %p31
      %p33 = scmp.ne.s32.totalorder %s22, %s23
      %p34 = scmp.eq.s32.totalorder %s14, 0
      %p35 = por %p33, %p34
      %p36 = scmp.ne.s32.totalorder %s22, %s23
      %p37 = scmp.eq.s32.totalorder %s15, 1
      %p38 = por %p36, %p37
      %p40 = scmp.ne.s32.totalorder %s23, %s39
      %p41 = scmp.eq.s32.totalorder %s15, 0
      %p42 = por %p40, %p41
      %s43 = sadd.s32 %s9, 1
      %s44 = smul.u32 %s43, 4
      %s45 = sadd.s32 %s16, 1
      %s46 = smul.u32 %s45, 4
      %s47 = ssub.s32 %s44, %s46
      %p48 = scmp.eq.s32.totalorder %s47, 0
      %s50 = sadd.s32 %s49, 1
      %s51 = scalar_select %p48, %s49, %s50
      %p54 = pneg %p48
      %p55 = scmp.eq.s32.totalorder %s9, 1
      %p56 = por %p54, %p55
      %p57 = scmp.ne.s32.totalorder %s49, %s52
      %p58 = scmp.eq.s32.totalorder %s9, 0
      %p59 = por %p57, %p58
      %p60 = scmp.ne.s32.totalorder %s49, %s52
      %p61 = scmp.eq.s32.totalorder %s14, 1
      %p62 = por %p60, %p61
      %p63 = scmp.ne.s32.totalorder %s52, %s53
      %p64 = scmp.eq.s32.totalorder %s14, 0
      %p65 = por %p63, %p64
      %p66 = scmp.ne.s32.totalorder %s52, %s53
      %p67 = scmp.eq.s32.totalorder %s15, 1
      %p68 = por %p66, %p67
      %p70 = scmp.ne.s32.totalorder %s53, %s69
      %p71 = scmp.eq.s32.totalorder %s15, 0
      %p72 = por %p70, %p71
      %s74 = sadd.s32 %s73, 1
      %p77 = scmp.eq.s32.totalorder %s9, 1
      %p78 = scmp.ne.s32.totalorder %s73, %s75
      %p79 = scmp.eq.s32.totalorder %s9, 0
      %p80 = por %p78, %p79
      %p81 = scmp.ne.s32.totalorder %s73, %s75
      %p82 = scmp.eq.s32.totalorder %s14, 1
      %p83 = por %p81, %p82
      %p84 = scmp.ne.s32.totalorder %s75, %s76
      %p85 = scmp.eq.s32.totalorder %s14, 0
      %p86 = por %p84, %p85
      %p87 = scmp.ne.s32.totalorder %s75, %s76
      %p88 = scmp.eq.s32.totalorder %s15, 1
      %p89 = por %p87, %p88
      %p91 = scmp.ne.s32.totalorder %s76, %s90
      %p92 = scmp.eq.s32.totalorder %s15, 0
      %p93 = por %p91, %p92
      %s94 = ssub.s32 %s9, %s16
      %p95 = scmp.eq.s32.totalorder %s94, 0
      %s97 = sadd.s32 %s96, 1
      %s98 = scalar_select %p95, %s96, %s97
      %p101 = pneg %p95
      %p102 = scmp.eq.s32.totalorder %s9, 1
      %p103 = por %p101, %p102
      %p104 = scmp.ne.s32.totalorder %s96, %s99
      %p105 = scmp.eq.s32.totalorder %s9, 0
      %p106 = por %p104, %p105
      %p107 = scmp.ne.s32.totalorder %s96, %s99
      %p108 = scmp.eq.s32.totalorder %s14, 1
      %p109 = por %p107, %p108
      %p110 = scmp.ne.s32.totalorder %s99, %s100
      %p111 = scmp.eq.s32.totalorder %s14, 0
      %p112 = por %p110, %p111
      %p113 = scmp.ne.s32.totalorder %s99, %s100
      %p114 = scmp.eq.s32.totalorder %s15, 1
      %p115 = por %p113, %p114
      %p117 = scmp.ne.s32.totalorder %s100, %s116
      %p118 = scmp.eq.s32.totalorder %s15, 0
      %p119 = por %p117, %p118
      %p120 = scmp.le.s32.totalorder 1, %s9
      %p121 = scmp.lt.s32.totalorder %s9, 3
      %p122 = pnand %p120, %p121
      %p123 = pneg %p122
      // Predicated region
      $region9: #{_lambda_.2} parent=5 // pred_check
        _
      $region10: #{_lambda_.2} parent=5 // pred_check_branch
        %125 = sbr.rel (%p122) target = $region12
      $region11: #{_lambda_.2} parent=5 // pred_region
        %s126 = ssub.s32 %s9, 1
        // Predicated region
        $region13: #{_lambda_.2} parent=11 // pred_check
          %p127 = pneg %p86
        $region14: #{_lambda_.2} parent=11 // pred_check_branch
          %129 = sbr.rel (%p127) target = $region16
        $region15: #{_lambda_.2} parent=11 // pred_region
          _
        $region16: #{_lambda_.2} parent=11 // pred_fallthru
          _
      $region12: #{_lambda_.2} parent=5 // pred_fallthru
        _
      %p130 = scmp.lt.s32.totalorder %s9, 2
      // Predicated region
      $region17: #{_lambda_.2} parent=5 // pred_check
        %p131 = pneg %p130
      $region18: #{_lambda_.2} parent=5 // pred_check_branch
        %133 = sbr.rel (%p131) target = $region20
      $region19: #{_lambda_.2} parent=5 // pred_region
        // Predicated region
        $region21: #{_lambda_.2} parent=19 // pred_check
          %p134 = pneg %p29
        $region22: #{_lambda_.2} parent=19 // pred_check_branch
          %136 = sbr.rel (%p134) target = $region24
        $region23: #{_lambda_.2} parent=19 // pred_region
          %s137 = sand.u32 %s19, 1
          %s138 = sand.u32 %s19, 1
          %s139 = smul.addr %s138, 128
          %s140 = scalar_lea.vmem [#allocation2], %s139
          %s141 = smul.u32 4, %s9
          %s142 = ssub.s32 9, %s141
          %p143 = scmp.lt.s32.totalorder %s142, 4
          %s144 = scalar_select %p143, %s142, 4
          %s145 = smul.u32 256, %s144
          %s146 = smul.u32 %s145, 2
          %p147 = scmp.ne.s32.totalorder 0, %s146
          %s148 = smul.addr %s141, 2
          %s149 = smul.addr %s148, 8
          %s150 = scalar_lea.vmem %s0, %s149
          %s151 = smul.u32 %s144, 2
          // Predicated region
          $region25: #{_lambda_.2} parent=23 // pred_check
            %p152 = pneg %p147
          $region26: #{_lambda_.2} parent=23 // pred_check_branch
            %154 = sbr.rel (%p152) target = $region28
          $region27: #{_lambda_.2} parent=23 // pred_region
            // Predicated region
            $region29: #{_lambda_.2} parent=27 // pred_check
              _
            $region30: #{_lambda_.2} parent=27 // pred_check_branch
              %156 = sbr.rel (0) target = $region32
            $region31: #{_lambda_.2} parent=27 // pred_region
              // Predicated region
              $region51: #{_lambda_.2} parent=31 // pred_check
                _
              $region52: #{_lambda_.2} parent=31 // pred_check_branch
                %238 = sbr.rel (0) target = $region54
              $region53: #{_lambda_.2} parent=31 // pred_region
                %s239 = sshrl.u32 %s151, 3
                // While loop
                $region55: #{_lambda_.2} parent=53 // loop_pre_header
                  _
                $region56: #{_lambda_.2} parent=53 // loop_header
                  %s241 = sphi 0, %s243
                  %p242 = scmp.ge.s32.totalorder %s241, %s239
                  %s246 = sphi 0, %s283
                  %s247 = sphi %s150, %s286
                  %s248 = sphi %s140, %s287
                $region57: #{_lambda_.2} parent=53 // loop_header_branch
                  %245 = sbr.rel (%p242) target = $region61
                $region58: #{_lambda_.2} parent=53 // loop_body
                  %v249 = vld [vmem:[%s247] sm:$0xff]
                  %250 = vst [vmem:[%s248] sm:$0xff] %v249
                  %v251 = vld [vmem:[%s247 + $0x8] sm:$0xff]
                  %252 = vst [vmem:[%s248 + $0x8] sm:$0xff] %v251
                  %v253 = vld [vmem:[%s247 + $0x10] sm:$0xff]
                  %254 = vst [vmem:[%s248 + $0x10] sm:$0xff] %v253
                  %v255 = vld [vmem:[%s247 + $0x18] sm:$0xff]
                  %256 = vst [vmem:[%s248 + $0x18] sm:$0xff] %v255
                  %v257 = vld [vmem:[%s247 + $0x20] sm:$0xff]
                  %258 = vst [vmem:[%s248 + $0x20] sm:$0xff] %v257
                  %v259 = vld [vmem:[%s247 + $0x28] sm:$0xff]
                  %260 = vst [vmem:[%s248 + $0x28] sm:$0xff] %v259
                  %v261 = vld [vmem:[%s247 + $0x30] sm:$0xff]
                  %262 = vst [vmem:[%s248 + $0x30] sm:$0xff] %v261
                  %v263 = vld [vmem:[%s247 + $0x38] sm:$0xff]
                  %264 = vst [vmem:[%s248 + $0x38] sm:$0xff] %v263
                  %v265 = vld [vmem:[%s247 + $0x90] sm:$0xff]
                  %266 = vst [vmem:[%s248 + $0x40] sm:$0xff] %v265
                  %v267 = vld [vmem:[%s247 + $0x98] sm:$0xff]
                  %268 = vst [vmem:[%s248 + $0x48] sm:$0xff] %v267
                  %v269 = vld [vmem:[%s247 + $0xa0] sm:$0xff]
                  %270 = vst [vmem:[%s248 + $0x50] sm:$0xff] %v269
                  %v271 = vld [vmem:[%s247 + $0xa8] sm:$0xff]
                  %272 = vst [vmem:[%s248 + $0x58] sm:$0xff] %v271
                  %v273 = vld [vmem:[%s247 + $0xb0] sm:$0xff]
                  %274 = vst [vmem:[%s248 + $0x60] sm:$0xff] %v273
                  %v275 = vld [vmem:[%s247 + $0xb8] sm:$0xff]
                  %276 = vst [vmem:[%s248 + $0x68] sm:$0xff] %v275
                  %v277 = vld [vmem:[%s247 + $0xc0] sm:$0xff]
                  %278 = vst [vmem:[%s248 + $0x70] sm:$0xff] %v277
                  %v279 = vld [vmem:[%s247 + $0xc8] sm:$0xff]
                  %280 = vst [vmem:[%s248 + $0x78] sm:$0xff] %v279
                  %s281 = sadd.s32 1, %s246
                  %p282 = scmp.ge.s32.totalorder %s281, %s239
                  %s283 = scalar_select %p282, 0, %s281
                  %s284 = smul.u32 %s283, 64
                  %s285 = smul.u32 %s283, 64
                  %s286 = scalar_lea.vmem %s150, %s284
                  %s287 = scalar_lea.vmem %s140, %s285 [#allocation2]
                $region59: #{_lambda_.2} parent=53 // loop_footer
                  %s243 = sadd.s32 %s241, 1
                $region60: #{_lambda_.2} parent=53 // loop_footer_branch
                  %240 = sbr.rel target = $region56
                $region61: #{_lambda_.2} parent=53 // loop_exit
                  _
                %s288 = sshrl.u32 %s151, 3
                %s289 = sand.u32 %s151, 7
                %s290 = smul.u32 %s288, 8
                %s291 = smul.u32 8, %s290
                %s292 = scalar_lea.vmem %s150, %s291
                %s293 = smul.u32 8, %s290
                %s294 = scalar_lea.vmem %s140, %s293 [#allocation2]
                // While loop
                $region62: #{_lambda_.2} parent=53 // loop_pre_header
                  _
                $region63: #{_lambda_.2} parent=53 // loop_header
                  %s296 = sphi 0, %s298
                  %p297 = scmp.ge.s32.totalorder %s296, %s289
                  %s301 = sphi 0, %s310
                  %s302 = sphi %s292, %s313
                  %s303 = sphi %s294, %s314
                $region64: #{_lambda_.2} parent=53 // loop_header_branch
                  %300 = sbr.rel (%p297) target = $region68
                $region65: #{_lambda_.2} parent=53 // loop_body
                  %v304 = vld [vmem:[%s302] sm:$0xff]
                  %305 = vst [vmem:[%s303] sm:$0xff] %v304
                  %v306 = vld [vmem:[%s302 + $0x90] sm:$0xff]
                  %307 = vst [vmem:[%s303 + $0x40] sm:$0xff] %v306
                  %s308 = sadd.s32 1, %s301
                  %p309 = scmp.ge.s32.totalorder %s308, %s289
                  %s310 = scalar_select %p309, 0, %s308
                  %s311 = smul.u32 %s310, 8
                  %s312 = smul.u32 %s310, 8
                  %s313 = scalar_lea.vmem %s292, %s311
                  %s314 = scalar_lea.vmem %s294, %s312 [#allocation2]
                $region66: #{_lambda_.2} parent=53 // loop_footer
                  %s298 = sadd.s32 %s296, 1
                $region67: #{_lambda_.2} parent=53 // loop_footer_branch
                  %295 = sbr.rel target = $region63
                $region68: #{_lambda_.2} parent=53 // loop_exit
                  _
              $region54: #{_lambda_.2} parent=31 // pred_fallthru
                _
              // Predicated region
              $region69: #{_lambda_.2} parent=31 // pred_check
                _
              $region70: #{_lambda_.2} parent=31 // pred_check_branch
                %316 = sbr.rel target = $region72
              $region71: #{_lambda_.2} parent=31 // pred_region
                _
              $region72: #{_lambda_.2} parent=31 // pred_fallthru
                _
            $region32: #{_lambda_.2} parent=27 // pred_fallthru
              _
            // Predicated region
            $region33: #{_lambda_.2} parent=27 // pred_check
              _
            $region34: #{_lambda_.2} parent=27 // pred_check_branch
              %158 = sbr.rel target = $region36
            $region35: #{_lambda_.2} parent=27 // pred_region
              %s160 = ssub.s32 256, 1
              %s161 = sshrl.u32 %s151, 3
              // While loop
              $region37: #{_lambda_.2} parent=35 // loop_pre_header
                _
              $region38: #{_lambda_.2} parent=35 // loop_header
                %s163 = sphi 0, %s165
                %p164 = scmp.ge.s32.totalorder %s163, %s161
                %s168 = sphi 0, %s205
                %s169 = sphi %s150, %s208
                %s170 = sphi %s140, %s209
              $region39: #{_lambda_.2} parent=35 // loop_header_branch
                %167 = sbr.rel (%p164) target = $region43
              $region40: #{_lambda_.2} parent=35 // loop_body
                %v171 = vld [vmem:[%s169] sm:%s160]
                %172 = vst [vmem:[%s170] sm:%s160] %v171
                %v173 = vld [vmem:[%s169 + $0x8] sm:%s160]
                %174 = vst [vmem:[%s170 + $0x8] sm:%s160] %v173
                %v175 = vld [vmem:[%s169 + $0x10] sm:%s160]
                %176 = vst [vmem:[%s170 + $0x10] sm:%s160] %v175
                %v177 = vld [vmem:[%s169 + $0x18] sm:%s160]
                %178 = vst [vmem:[%s170 + $0x18] sm:%s160] %v177
                %v179 = vld [vmem:[%s169 + $0x20] sm:%s160]
                %180 = vst [vmem:[%s170 + $0x20] sm:%s160] %v179
                %v181 = vld [vmem:[%s169 + $0x28] sm:%s160]
                %182 = vst [vmem:[%s170 + $0x28] sm:%s160] %v181
                %v183 = vld [vmem:[%s169 + $0x30] sm:%s160]
                %184 = vst [vmem:[%s170 + $0x30] sm:%s160] %v183
                %v185 = vld [vmem:[%s169 + $0x38] sm:%s160]
                %186 = vst [vmem:[%s170 + $0x38] sm:%s160] %v185
                %v187 = vld [vmem:[%s169 + $0x90] sm:%s160]
                %188 = vst [vmem:[%s170 + $0x40] sm:%s160] %v187
                %v189 = vld [vmem:[%s169 + $0x98] sm:%s160]
                %190 = vst [vmem:[%s170 + $0x48] sm:%s160] %v189
                %v191 = vld [vmem:[%s169 + $0xa0] sm:%s160]
                %192 = vst [vmem:[%s170 + $0x50] sm:%s160] %v191
                %v193 = vld [vmem:[%s169 + $0xa8] sm:%s160]
                %194 = vst [vmem:[%s170 + $0x58] sm:%s160] %v193
                %v195 = vld [vmem:[%s169 + $0xb0] sm:%s160]
                %196 = vst [vmem:[%s170 + $0x60] sm:%s160] %v195
                %v197 = vld [vmem:[%s169 + $0xb8] sm:%s160]
                %198 = vst [vmem:[%s170 + $0x68] sm:%s160] %v197
                %v199 = vld [vmem:[%s169 + $0xc0] sm:%s160]
                %200 = vst [vmem:[%s170 + $0x70] sm:%s160] %v199
                %v201 = vld [vmem:[%s169 + $0xc8] sm:%s160]
                %202 = vst [vmem:[%s170 + $0x78] sm:%s160] %v201
                %s203 = sadd.s32 1, %s168
                %p204 = scmp.ge.s32.totalorder %s203, %s161
                %s205 = scalar_select %p204, 0, %s203
                %s206 = smul.u32 %s205, 64
                %s207 = smul.u32 %s205, 64
                %s208 = scalar_lea.vmem %s150, %s206
                %s209 = scalar_lea.vmem %s140, %s207 [#allocation2]
              $region41: #{_lambda_.2} parent=35 // loop_footer
                %s165 = sadd.s32 %s163, 1
              $region42: #{_lambda_.2} parent=35 // loop_footer_branch
                %162 = sbr.rel target = $region38
              $region43: #{_lambda_.2} parent=35 // loop_exit
                _
              %s210 = sshrl.u32 %s151, 3
              %s211 = sand.u32 %s151, 7
              %s212 = smul.u32 %s210, 8
              %s213 = smul.u32 8, %s212
              %s214 = scalar_lea.vmem %s150, %s213
              %s215 = smul.u32 8, %s212
              %s216 = scalar_lea.vmem %s140, %s215 [#allocation2]
              // While loop
              $region44: #{_lambda_.2} parent=35 // loop_pre_header
                _
              $region45: #{_lambda_.2} parent=35 // loop_header
                %s218 = sphi 0, %s220
                %p219 = scmp.ge.s32.totalorder %s218, %s211
                %s223 = sphi 0, %s232
                %s224 = sphi %s214, %s235
                %s225 = sphi %s216, %s236
              $region46: #{_lambda_.2} parent=35 // loop_header_branch
                %222 = sbr.rel (%p219) target = $region50
              $region47: #{_lambda_.2} parent=35 // loop_body
                %v226 = vld [vmem:[%s224] sm:%s160]
                %227 = vst [vmem:[%s225] sm:%s160] %v226
                %v228 = vld [vmem:[%s224 + $0x90] sm:%s160]
                %229 = vst [vmem:[%s225 + $0x40] sm:%s160] %v228
                %s230 = sadd.s32 1, %s223
                %p231 = scmp.ge.s32.totalorder %s230, %s211
                %s232 = scalar_select %p231, 0, %s230
                %s233 = smul.u32 %s232, 8
                %s234 = smul.u32 %s232, 8
                %s235 = scalar_lea.vmem %s214, %s233
                %s236 = scalar_lea.vmem %s216, %s234 [#allocation2]
              $region48: #{_lambda_.2} parent=35 // loop_footer
                %s220 = sadd.s32 %s218, 1
              $region49: #{_lambda_.2} parent=35 // loop_footer_branch
                %217 = sbr.rel target = $region45
              $region50: #{_lambda_.2} parent=35 // loop_exit
                _
            $region36: #{_lambda_.2} parent=27 // pred_fallthru
              _
          $region28: #{_lambda_.2} parent=23 // pred_fallthru
            _
          %317 = vnop
        $region24: #{_lambda_.2} parent=19 // pred_fallthru
          _
        // Predicated region
        $region73: #{_lambda_.2} parent=19 // pred_check
          %p318 = pneg %p59
        $region74: #{_lambda_.2} parent=19 // pred_check_branch
          %320 = sbr.rel (%p318) target = $region76
        $region75: #{_lambda_.2} parent=19 // pred_region
          %s321 = sand.u32 %s49, 1
          %s322 = sand.u32 %s49, 1
          %s323 = smul.addr %s322, 32
          %s324 = scalar_lea.vmem [#allocation3], %s323
          %s325 = sadd.s32 %s9, 1
          %s326 = smul.u32 %s325, 4
          %s327 = smul.addr %s326, 2
          %s328 = smul.addr %s327, 8
          %s329 = scalar_lea.vmem %s1, %s328
          // Predicated region
          $region77: #{_lambda_.2} parent=75 // pred_check
            _
          $region78: #{_lambda_.2} parent=75 // pred_check_branch
            %331 = sbr.rel (0) target = $region80
          $region79: #{_lambda_.2} parent=75 // pred_region
            // Predicated region
            $region81: #{_lambda_.2} parent=79 // pred_check
              _
            $region82: #{_lambda_.2} parent=79 // pred_check_branch
              %333 = sbr.rel (0) target = $region84
            $region83: #{_lambda_.2} parent=79 // pred_region
              // Predicated region
              $region96: #{_lambda_.2} parent=83 // pred_check
                _
              $region97: #{_lambda_.2} parent=83 // pred_check_branch
                %355 = sbr.rel (0) target = $region99
              $region98: #{_lambda_.2} parent=83 // pred_region
                loop: start=0, step=1, limit=1
                $region100: #{_lambda_.2} parent=98 // loop_pre_header
                  _
                $region101: #{_lambda_.2} parent=98 // loop_header
                  %s357 = sphi 0, %s361
                  %p358 = scmp.ge.s32.totalorder %s357, 1
                  %s362 = sphi %s329, %s329
                  %s363 = sphi %s324, %s324
                $region102: #{_lambda_.2} parent=98 // loop_header_branch
                  %360 = sbr.rel (%p358) target = $region106
                $region103: #{_lambda_.2} parent=98 // loop_body
                  %v364 = vld [vmem:[%s362] sm:$0xff]
                  %365 = vst [vmem:[%s363] sm:$0xff] %v364
                  %v366 = vld [vmem:[%s362 + $0x8] sm:$0xff]
                  %367 = vst [vmem:[%s363 + $0x8] sm:$0xff] %v366
                  %v368 = vld [vmem:[%s362 + $0x90] sm:$0xff]
                  %369 = vst [vmem:[%s363 + $0x10] sm:$0xff] %v368
                  %v370 = vld [vmem:[%s362 + $0x98] sm:$0xff]
                  %371 = vst [vmem:[%s363 + $0x18] sm:$0xff] %v370
                $region104: #{_lambda_.2} parent=98 // loop_footer
                  %s361 = sadd.s32 1, %s357
                $region105: #{_lambda_.2} parent=98 // loop_footer_branch
                  %356 = sbr.rel target = $region101
                $region106: #{_lambda_.2} parent=98 // loop_exit
                  _
              $region99: #{_lambda_.2} parent=83 // pred_fallthru
                _
              // Predicated region
              $region107: #{_lambda_.2} parent=83 // pred_check
                _
              $region108: #{_lambda_.2} parent=83 // pred_check_branch
                %373 = sbr.rel target = $region110
              $region109: #{_lambda_.2} parent=83 // pred_region
                _
              $region110: #{_lambda_.2} parent=83 // pred_fallthru
                _
            $region84: #{_lambda_.2} parent=79 // pred_fallthru
              _
            // Predicated region
            $region85: #{_lambda_.2} parent=79 // pred_check
              _
            $region86: #{_lambda_.2} parent=79 // pred_check_branch
              %335 = sbr.rel target = $region88
            $region87: #{_lambda_.2} parent=79 // pred_region
              %s337 = ssub.s32 256, 1
              loop: start=0, step=1, limit=1
              $region89: #{_lambda_.2} parent=87 // loop_pre_header
                _
              $region90: #{_lambda_.2} parent=87 // loop_header
                %s339 = sphi 0, %s343
                %p340 = scmp.ge.s32.totalorder %s339, 1
                %s344 = sphi %s329, %s329
                %s345 = sphi %s324, %s324
              $region91: #{_lambda_.2} parent=87 // loop_header_branch
                %342 = sbr.rel (%p340) target = $region95
              $region92: #{_lambda_.2} parent=87 // loop_body
                %v346 = vld [vmem:[%s344] sm:%s337]
                %347 = vst [vmem:[%s345] sm:%s337] %v346
                %v348 = vld [vmem:[%s344 + $0x8] sm:%s337]
                %349 = vst [vmem:[%s345 + $0x8] sm:%s337] %v348
                %v350 = vld [vmem:[%s344 + $0x90] sm:%s337]
                %351 = vst [vmem:[%s345 + $0x10] sm:%s337] %v350
                %v352 = vld [vmem:[%s344 + $0x98] sm:%s337]
                %353 = vst [vmem:[%s345 + $0x18] sm:%s337] %v352
              $region93: #{_lambda_.2} parent=87 // loop_footer
                %s343 = sadd.s32 1, %s339
              $region94: #{_lambda_.2} parent=87 // loop_footer_branch
                %338 = sbr.rel target = $region90
              $region95: #{_lambda_.2} parent=87 // loop_exit
                _
            $region88: #{_lambda_.2} parent=79 // pred_fallthru
              _
          $region80: #{_lambda_.2} parent=75 // pred_fallthru
            _
          %374 = vnop
        $region76: #{_lambda_.2} parent=19 // pred_fallthru
          _
      $region20: #{_lambda_.2} parent=5 // pred_fallthru
        _
      %p375 = scmp.le.s32.totalorder 1, %s9
      %p376 = scmp.lt.s32.totalorder %s9, 3
      %p377 = pnand %p375, %p376
      %p378 = pneg %p377
      // Predicated region
      $region111: #{_lambda_.2} parent=5 // pred_check
        _
      $region112: #{_lambda_.2} parent=5 // pred_check_branch
        %380 = sbr.rel (%p377) target = $region114
      $region113: #{_lambda_.2} parent=5 // pred_region
        %s381 = ssub.s32 %s9, 1
        %s382 = sand.u32 %s22, 1
        %s383 = sand.u32 %s22, 1
        %s384 = smul.addr %s383, 128
        %s385 = scalar_lea.vmem [#allocation2], %s384
        // Predicated region
        $region115: #{_lambda_.2} parent=113 // pred_check
          %p386 = pneg %p35
        $region116: #{_lambda_.2} parent=113 // pred_check_branch
          %388 = sbr.rel (%p386) target = $region118
        $region117: #{_lambda_.2} parent=113 // pred_region
          _
        $region118: #{_lambda_.2} parent=113 // pred_fallthru
          _
        %s389 = sand.u32 %s52, 1
        %s390 = sand.u32 %s52, 1
        %s391 = smul.addr %s390, 32
        %s392 = scalar_lea.vmem [#allocation3], %s391
        // Predicated region
        $region119: #{_lambda_.2} parent=113 // pred_check
          %p393 = pneg %p65
        $region120: #{_lambda_.2} parent=113 // pred_check_branch
          %395 = sbr.rel (%p393) target = $region122
        $region121: #{_lambda_.2} parent=113 // pred_region
          _
        $region122: #{_lambda_.2} parent=113 // pred_fallthru
          _
        %s396 = sand.u32 %s22, 1
        %s397 = sand.u32 %s22, 1
        %s398 = smul.addr %s397, 128
        %s399 = scalar_lea.vmem [#allocation2], %s398
        %p400 = pneg %p35
        %p401 = pneg %p32
        %s402 = sand.u32 %s52, 1
        %s403 = sand.u32 %s52, 1
        %s404 = smul.addr %s403, 32
        %s405 = scalar_lea.vmem [#allocation3], %s404
        %p406 = pneg %p65
        %p407 = pneg %p62
        %p408 = pneg %p86
        %p409 = pneg %p83
        %p410 = pneg %p112
        %p411 = pneg %p109
        %s412 = sand.u32 %s99, 1
        %s413 = sand.u32 %s99, 1
        %s414 = smul.addr %s413, 64
        %s415 = scalar_lea.vmem [#allocation4], %s414
        %s416 = smul.u32 4, %s14
        %s417 = ssub.s32 9, %s416
        %p418 = scmp.lt.s32.totalorder %s417, 4
        %s419 = scalar_select %p418, %s417, 4
        %s420 = smul.u32 256, %s419
        %s421 = smul.u32 %s420, 2
        %s422 = sadd.s32 %s14, 1
        %s423 = smul.u32 %s422, 4
        %s424 = smul.u32 4, %s14
        %v425 = vld [vmem:[%s385] sm:$0xff]
        %v426 = vld [vmem:[%s385 + $0x8] sm:$0x1]
        %v427 = vld [vmem:[%s385 + $0x10] sm:$0xff]
        %v428 = vld [vmem:[%s385 + $0x18] sm:$0x1]
        %v429 = vld [vmem:[%s385 + $0x20] sm:$0xff]
        %v430 = vld [vmem:[%s385 + $0x28] sm:$0x1]
        %v431 = vld [vmem:[%s385 + $0x30] sm:$0xff]
        %v432 = vld [vmem:[%s385 + $0x38] sm:$0x1]
        %v433 = vld [vmem:[%s385 + $0x40] sm:$0xff]
        %v434 = vld [vmem:[%s385 + $0x48] sm:$0x1]
        %v435 = vld [vmem:[%s385 + $0x50] sm:$0xff]
        %v436 = vld [vmem:[%s385 + $0x58] sm:$0x1]
        %v437 = vld [vmem:[%s385 + $0x60] sm:$0xff]
        %v438 = vld [vmem:[%s385 + $0x68] sm:$0x1]
        %v439 = vld [vmem:[%s385 + $0x70] sm:$0xff]
        %v440 = vld [vmem:[%s385 + $0x78] sm:$0x1]
        %v441 = vld [vmem:[%s392] sm:$0xff]
        %v442 = vld [vmem:[%s392 + $0x8] sm:$0x1]
        %v443 = vld [vmem:[%s392 + $0x10] sm:$0xff]
        %v444 = vld [vmem:[%s392 + $0x18] sm:$0x1]
        %vm461 = vcmask 1046528
        %v462 = vrot.slane %v425, 1
        %v463 = vrot.slane %v426, 1
        %v464 = vsel %vm461, %v462, %v463
        %v465 = vrot.slane %v427, 1
        %v466 = vrot.slane %v428, 1
        %v467 = vsel %vm461, %v465, %v466
        %v468 = vrot.slane %v429, 1
        %v469 = vrot.slane %v430, 1
        %v470 = vsel %vm461, %v468, %v469
        %v471 = vrot.slane %v431, 1
        %v472 = vrot.slane %v432, 1
        %v473 = vsel %vm461, %v471, %v472
        %v474 = vrot.slane %v433, 1
        %v475 = vrot.slane %v434, 1
        %v476 = vsel %vm461, %v474, %v475
        %v477 = vrot.slane %v435, 1
        %v478 = vrot.slane %v436, 1
        %v479 = vsel %vm461, %v477, %v478
        %v480 = vrot.slane %v437, 1
        %v481 = vrot.slane %v438, 1
        %v482 = vsel %vm461, %v480, %v481
        %v483 = vrot.slane %v439, 1
        %v484 = vrot.slane %v440, 1
        %v485 = vsel %vm461, %v483, %v484
        %486 = vrot.lane.b32.xlu0 %v464, 16
        %v487 = vpop.permute.xlu0 %486
        %488 = vrot.lane.b32.xlu0 %v467, 16
        %v489 = vpop.permute.xlu0 %488
        %490 = vrot.lane.b32.xlu0 %v470, 16
        %v491 = vpop.permute.xlu0 %490
        %492 = vrot.lane.b32.xlu0 %v473, 16
        %v493 = vpop.permute.xlu0 %492
        %494 = vrot.lane.b32.xlu0 %v476, 16
        %v495 = vpop.permute.xlu0 %494
        %496 = vrot.lane.b32.xlu0 %v479, 16
        %v497 = vpop.permute.xlu0 %496
        %498 = vrot.lane.b32.xlu0 %v482, 16
        %v499 = vpop.permute.xlu0 %498
        %500 = vrot.lane.b32.xlu0 %v485, 16
        %v501 = vpop.permute.xlu0 %500
        %512 = vrot.lane.b32.xlu0 %v427, 32
        %v513 = vpop.permute.xlu0 %512
        %514 = vrot.lane.b32.xlu0 %v429, 32
        %v515 = vpop.permute.xlu0 %514
        %516 = vrot.lane.b32.xlu0 %v431, 32
        %v517 = vpop.permute.xlu0 %516
        %518 = vrot.lane.b32.xlu0 %v441, 32
        %v519 = vpop.permute.xlu0 %518
        %520 = vrot.lane.b32.xlu0 %v435, 32
        %v521 = vpop.permute.xlu0 %520
        %522 = vrot.lane.b32.xlu0 %v437, 32
        %v523 = vpop.permute.xlu0 %522
        %524 = vrot.lane.b32.xlu0 %v439, 32
        %v525 = vpop.permute.xlu0 %524
        %526 = vrot.lane.b32.xlu0 %v443, 32
        %v527 = vpop.permute.xlu0 %526
        %v538 = vrot.slane %v441, 1
        %v539 = vrot.slane %v442, 1
        %v540 = vsel %vm461, %v538, %v539
        %v541 = vrot.slane %v443, 1
        %v542 = vrot.slane %v444, 1
        %v543 = vsel %vm461, %v541, %v542
        %544 = vrot.lane.b32.xlu0 %v467, 48
        %v545 = vpop.permute.xlu0 %544
        %546 = vrot.lane.b32.xlu0 %v470, 48
        %v547 = vpop.permute.xlu0 %546
        %548 = vrot.lane.b32.xlu0 %v473, 48
        %v549 = vpop.permute.xlu0 %548
        %550 = vrot.lane.b32.xlu0 %v540, 48
        %v551 = vpop.permute.xlu0 %550
        %552 = vrot.lane.b32.xlu0 %v479, 48
        %v553 = vpop.permute.xlu0 %552
        %554 = vrot.lane.b32.xlu0 %v482, 48
        %v555 = vpop.permute.xlu0 %554
        %556 = vrot.lane.b32.xlu0 %v485, 48
        %v557 = vpop.permute.xlu0 %556
        %558 = vrot.lane.b32.xlu0 %v543, 48
        %v559 = vpop.permute.xlu0 %558
        %vm568 = vcmask 130048
        %v569 = vsel %vm568, %v425, %v487
        %v570 = vsel %vm568, %v427, %v489
        %v571 = vsel %vm568, %v429, %v491
        %v572 = vsel %vm568, %v431, %v493
        %v573 = vsel %vm568, %v433, %v495
        %v574 = vsel %vm568, %v435, %v497
        %v575 = vsel %vm568, %v437, %v499
        %v576 = vsel %vm568, %v439, %v501
        %vm577 = vcmask 261120
        %v578 = vsel %vm577, %v569, %v513
        %v579 = vsel %vm577, %v570, %v515
        %v580 = vsel %vm577, %v571, %v517
        %v581 = vsel %vm577, %v572, %v519
        %v582 = vsel %vm577, %v573, %v521
        %v583 = vsel %vm577, %v574, %v523
        %v584 = vsel %vm577, %v575, %v525
        %v585 = vsel %vm577, %v576, %v527
        %vm586 = vcmask 392192
        %v587 = vsel %vm586, %v578, %v545
        %v588 = vsel %vm586, %v579, %v547
        %v589 = vsel %vm586, %v580, %v549
        %v590 = vsel %vm586, %v581, %v551
        %v591 = vsel %vm586, %v582, %v553
        %v592 = vsel %vm586, %v583, %v555
        %v593 = vsel %vm586, %v584, %v557
        %v594 = vsel %vm586, %v585, %v559
        %v595 = vld [vmem:[%s2] sm:$0xff]
        %v596 = vld [vmem:[%s2 + $0x8] sm:$0xff]
        %v597 = vld [vmem:[%s2 + $0x10] sm:$0xff]
        %v598 = vld [vmem:[%s2 + $0x18] sm:$0xff]
        %v599 = vld [vmem:[%s2 + $0x20] sm:$0xff]
        %v600 = vld [vmem:[%s2 + $0x28] sm:$0xff]
        %v601 = vld [vmem:[%s2 + $0x30] sm:$0xff]
        %v602 = vld [vmem:[%s2 + $0x38] sm:$0xff]
        %vm603 = vcmask 523264
        %v605 = vsel %vm603, %v587, 0
        %v608 = vsel %vm603, %v588, 0
        %v611 = vsel %vm603, %v589, 0
        %v614 = vsel %vm603, %v590, 0
        %v617 = vsel %vm603, %v591, 0
        %v620 = vsel %vm603, %v592, 0
        %v623 = vsel %vm603, %v593, 0
        %v626 = vsel %vm603, %v594, 0
        %628 = vmatprep.subr.mxu0 0.0
        %629 = vmatpush1.msra.mxu0 0.0
        %630 = vmatprep.subr.mxu0 0.0
        %631 = vmatpush1.msra.mxu0 0.0
        %632 = vmatprep.subr.mxu0 0.0
        %633 = vmatpush1.msra.mxu0 0.0
        %634 = vmatprep.subr.mxu0 0.0
        %635 = vmatpush1.msra.mxu0 0.0
        %636 = vmatprep.subr.mxu0 0.0
        %637 = vmatpush1.msra.mxu0 0.0
        %638 = vmatprep.subr.mxu0 0.0
        %639 = vmatpush1.msra.mxu0 0.0
        %640 = vmatprep.subr.mxu0 0.0
        %641 = vmatpush1.msra.mxu0 0.0
        %642 = vmatprep.subr.mxu0 0.0
        %643 = vmatpush1.msra.mxu0 0.0
        %644 = vmatprep.subr.mxu0 0.0
        %645 = vmatpush1.msra.mxu0 %v602
        %646 = vmatprep.subr.mxu0 0.0
        %647 = vmatpush1.msra.mxu0 %v601
        %648 = vmatprep.subr.mxu0 0.0
        %649 = vmatpush1.msra.mxu0 %v600
        %650 = vmatprep.subr.mxu0 0.0
        %651 = vmatpush1.msra.mxu0 %v599
        %652 = vmatprep.subr.mxu0 0.0
        %653 = vmatpush1.msra.mxu0 %v598
        %654 = vmatprep.subr.mxu0 0.0
        %655 = vmatpush1.msra.mxu0 %v597
        %656 = vmatprep.subr.mxu0 0.0
        %657 = vmatpush1.msra.mxu0 %v596
        %658 = vmatprep.subr.mxu0 0.0
        %659 = vmatpush1.msra.mxu0 %v595
        %660 = vmatprep.subr.mxu0 0.0
        %661 = vmatpush2.msra.mxu0 0.0
        %662 = vmatprep.subr.mxu0 0.0
        %663 = vmatpush2.msra.mxu0 0.0
        %664 = vmatprep.subr.mxu0 0.0
        %665 = vmatpush2.msra.mxu0 0.0
        %666 = vmatprep.subr.mxu0 0.0
        %667 = vmatpush2.msra.mxu0 0.0
        %668 = vmatprep.subr.mxu0 0.0
        %669 = vmatpush2.msra.mxu0 0.0
        %670 = vmatprep.subr.mxu0 0.0
        %671 = vmatpush2.msra.mxu0 0.0
        %672 = vmatprep.subr.mxu0 0.0
        %673 = vmatpush2.msra.mxu0 0.0
        %674 = vmatprep.subr.mxu0 0.0
        %675 = vmatpush2.msra.mxu0 0.0
        %676 = vmatprep.subr.mxu0 0.0
        %677 = vmatpush2.msra.mxu0 0.0
        %678 = vmatprep.subr.mxu0 0.0
        %679 = vmatpush2.msra.mxu0 0.0
        %680 = vmatprep.subr.mxu0 0.0
        %681 = vmatpush2.msra.mxu0 0.0
        %682 = vmatprep.subr.mxu0 0.0
        %683 = vmatpush2.msra.mxu0 0.0
        %684 = vmatprep.subr.mxu0 0.0
        %685 = vmatpush2.msra.mxu0 0.0
        %686 = vmatprep.subr.mxu0 0.0
        %687 = vmatpush2.msra.mxu0 0.0
        %688 = vmatprep.subr.mxu0 0.0
        %689 = vmatpush2.msra.mxu0 0.0
        %690 = vmatprep.subr.mxu0 0.0
        %691 = vmatpush2.msra.mxu0 0.0
        %692 = vmatprep.mubr.f32.mxu0 0.0
        %693 = vmatmul.mubr.f32.gmra.mxu0 %v605
        %v694 = vpop.f32.mrf.mxu0
        %v695 = vadd.f32 0.0, %v694
        %v696 = vpop.f32.mrf.mxu0
        %697 = vmatprep.mubr.f32.mxu0 0.0
        %698 = vmatmul.mubr.f32.gmra.mxu0 %v608
        %v699 = vpop.f32.mrf.mxu0
        %v700 = vadd.f32 0.0, %v699
        %v701 = vpop.f32.mrf.mxu0
        %702 = vmatprep.mubr.f32.mxu0 0.0
        %703 = vmatmul.mubr.f32.gmra.mxu0 %v611
        %v704 = vpop.f32.mrf.mxu0
        %v705 = vadd.f32 0.0, %v704
        %v706 = vpop.f32.mrf.mxu0
        %707 = vmatprep.mubr.f32.mxu0 0.0
        %708 = vmatmul.mubr.f32.gmra.mxu0 %v614
        %v709 = vpop.f32.mrf.mxu0
        %v710 = vadd.f32 0.0, %v709
        %v711 = vpop.f32.mrf.mxu0
        %712 = vmatprep.mubr.f32.mxu0 0.0
        %713 = vmatmul.mubr.f32.gmra.mxu0 %v617
        %v714 = vpop.f32.mrf.mxu0
        %v715 = vadd.f32 0.0, %v714
        %v716 = vpop.f32.mrf.mxu0
        %717 = vmatprep.mubr.f32.mxu0 0.0
        %718 = vmatmul.mubr.f32.gmra.mxu0 %v620
        %v719 = vpop.f32.mrf.mxu0
        %v720 = vadd.f32 0.0, %v719
        %v721 = vpop.f32.mrf.mxu0
        %722 = vmatprep.mubr.f32.mxu0 0.0
        %723 = vmatmul.mubr.f32.gmra.mxu0 %v623
        %v724 = vpop.f32.mrf.mxu0
        %v725 = vadd.f32 0.0, %v724
        %v726 = vpop.f32.mrf.mxu0
        %727 = vmatprep.mubr.f32.mxu0 0.0
        %728 = vmatmul.mubr.f32.gmra.mxu0 %v626
        %v729 = vpop.f32.mrf.mxu0
        %v730 = vadd.f32 0.0, %v729
        %v731 = vpop.f32.mrf.mxu0
        %732 = vdwg.mxu0
        %733 = vst.msk [vmem:[%s415] sm:$0xff] %vm568, %v695
        %734 = vst.msk [vmem:[%s415 + $0x8] sm:$0xff] %vm568, %v700
        %735 = vst.msk [vmem:[%s415 + $0x10] sm:$0xff] %vm568, %v705
        %736 = vst.msk [vmem:[%s415 + $0x18] sm:$0xff] %vm568, %v710
        %737 = vst.msk [vmem:[%s415 + $0x20] sm:$0xff] %vm568, %v715
        %738 = vst.msk [vmem:[%s415 + $0x28] sm:$0xff] %vm568, %v720
        %739 = vst.msk [vmem:[%s415 + $0x30] sm:$0xff] %vm568, %v725
        %740 = vst.msk [vmem:[%s415 + $0x38] sm:$0xff] %vm568, %v730
        %s741 = sand.u32 %s99, 1
        %s742 = sand.u32 %s99, 1
        %s743 = smul.addr %s742, 64
        %s744 = scalar_lea.vmem [#allocation4], %s743
        // Predicated region
        $region123: #{_lambda_.2} parent=113 // pred_check
          %p745 = pneg %p109
        $region124: #{_lambda_.2} parent=113 // pred_check_branch
          %747 = sbr.rel (%p745) target = $region126
        $region125: #{_lambda_.2} parent=113 // pred_region
          %s748 = smul.u32 4, %s14
          %s749 = smul.addr %s748, 8
          %s750 = scalar_lea.vmem %s3, %s749
          // Predicated region
          $region127: #{_lambda_.2} parent=125 // pred_check
            _
          $region128: #{_lambda_.2} parent=125 // pred_check_branch
            %752 = sbr.rel (0) target = $region130
          $region129: #{_lambda_.2} parent=125 // pred_region
            // Predicated region
            $region131: #{_lambda_.2} parent=129 // pred_check
              _
            $region132: #{_lambda_.2} parent=129 // pred_check_branch
              %754 = sbr.rel (0) target = $region134
            $region133: #{_lambda_.2} parent=129 // pred_region
              // Predicated region
              $region146: #{_lambda_.2} parent=133 // pred_check
                _
              $region147: #{_lambda_.2} parent=133 // pred_check_branch
                %784 = sbr.rel (0) target = $region149
              $region148: #{_lambda_.2} parent=133 // pred_region
                loop: start=0, step=1, limit=1
                $region150: #{_lambda_.2} parent=148 // loop_pre_header
                  _
                $region151: #{_lambda_.2} parent=148 // loop_header
                  %s786 = sphi 0, %s790
                  %p787 = scmp.ge.s32.totalorder %s786, 1
                  %s791 = sphi %s744, %s744
                  %s792 = sphi %s750, %s750
                $region152: #{_lambda_.2} parent=148 // loop_header_branch
                  %789 = sbr.rel (%p787) target = $region156
                $region153: #{_lambda_.2} parent=148 // loop_body
                  %v793 = vld [vmem:[%s791] sm:$0xff]
                  %794 = vst [vmem:[%s792] sm:$0xff] %v793
                  %v795 = vld [vmem:[%s791 + $0x8] sm:$0xff]
                  %796 = vst [vmem:[%s792 + $0x8] sm:$0xff] %v795
                  %v797 = vld [vmem:[%s791 + $0x10] sm:$0xff]
                  %798 = vst [vmem:[%s792 + $0x10] sm:$0xff] %v797
                  %v799 = vld [vmem:[%s791 + $0x18] sm:$0xff]
                  %800 = vst [vmem:[%s792 + $0x18] sm:$0xff] %v799
                  %v801 = vld [vmem:[%s791 + $0x20] sm:$0xff]
                  %802 = vst [vmem:[%s792 + $0x40] sm:$0xff] %v801
                  %v803 = vld [vmem:[%s791 + $0x28] sm:$0xff]
                  %804 = vst [vmem:[%s792 + $0x48] sm:$0xff] %v803
                  %v805 = vld [vmem:[%s791 + $0x30] sm:$0xff]
                  %806 = vst [vmem:[%s792 + $0x50] sm:$0xff] %v805
                  %v807 = vld [vmem:[%s791 + $0x38] sm:$0xff]
                  %808 = vst [vmem:[%s792 + $0x58] sm:$0xff] %v807
                $region154: #{_lambda_.2} parent=148 // loop_footer
                  %s790 = sadd.s32 1, %s786
                $region155: #{_lambda_.2} parent=148 // loop_footer_branch
                  %785 = sbr.rel target = $region151
                $region156: #{_lambda_.2} parent=148 // loop_exit
                  _
              $region149: #{_lambda_.2} parent=133 // pred_fallthru
                _
              // Predicated region
              $region157: #{_lambda_.2} parent=133 // pred_check
                _
              $region158: #{_lambda_.2} parent=133 // pred_check_branch
                %810 = sbr.rel target = $region160
              $region159: #{_lambda_.2} parent=133 // pred_region
                _
              $region160: #{_lambda_.2} parent=133 // pred_fallthru
                _
            $region134: #{_lambda_.2} parent=129 // pred_fallthru
              _
            // Predicated region
            $region135: #{_lambda_.2} parent=129 // pred_check
              _
            $region136: #{_lambda_.2} parent=129 // pred_check_branch
              %756 = sbr.rel target = $region138
            $region137: #{_lambda_.2} parent=129 // pred_region
              %s758 = ssub.s32 256, 1
              loop: start=0, step=1, limit=1
              $region139: #{_lambda_.2} parent=137 // loop_pre_header
                _
              $region140: #{_lambda_.2} parent=137 // loop_header
                %s760 = sphi 0, %s764
                %p761 = scmp.ge.s32.totalorder %s760, 1
                %s765 = sphi %s744, %s744
                %s766 = sphi %s750, %s750
              $region141: #{_lambda_.2} parent=137 // loop_header_branch
                %763 = sbr.rel (%p761) target = $region145
              $region142: #{_lambda_.2} parent=137 // loop_body
                %v767 = vld [vmem:[%s765] sm:%s758]
                %768 = vst [vmem:[%s766] sm:%s758] %v767
                %v769 = vld [vmem:[%s765 + $0x8] sm:%s758]
                %770 = vst [vmem:[%s766 + $0x8] sm:%s758] %v769
                %v771 = vld [vmem:[%s765 + $0x10] sm:%s758]
                %772 = vst [vmem:[%s766 + $0x10] sm:%s758] %v771
                %v773 = vld [vmem:[%s765 + $0x18] sm:%s758]
                %774 = vst [vmem:[%s766 + $0x18] sm:%s758] %v773
                %v775 = vld [vmem:[%s765 + $0x20] sm:%s758]
                %776 = vst [vmem:[%s766 + $0x40] sm:%s758] %v775
                %v777 = vld [vmem:[%s765 + $0x28] sm:%s758]
                %778 = vst [vmem:[%s766 + $0x48] sm:%s758] %v777
                %v779 = vld [vmem:[%s765 + $0x30] sm:%s758]
                %780 = vst [vmem:[%s766 + $0x50] sm:%s758] %v779
                %v781 = vld [vmem:[%s765 + $0x38] sm:%s758]
                %782 = vst [vmem:[%s766 + $0x58] sm:%s758] %v781
              $region143: #{_lambda_.2} parent=137 // loop_footer
                %s764 = sadd.s32 1, %s760
              $region144: #{_lambda_.2} parent=137 // loop_footer_branch
                %759 = sbr.rel target = $region140
              $region145: #{_lambda_.2} parent=137 // loop_exit
                _
            $region138: #{_lambda_.2} parent=129 // pred_fallthru
              _
          $region130: #{_lambda_.2} parent=125 // pred_fallthru
            _
          %811 = vnop
        $region126: #{_lambda_.2} parent=113 // pred_fallthru
          _
      $region114: #{_lambda_.2} parent=5 // pred_fallthru
        _
      %p812 = scmp.le.s32.totalorder 2, %s9
      // Predicated region
      $region161: #{_lambda_.2} parent=5 // pred_check
        %p813 = pneg %p812
      $region162: #{_lambda_.2} parent=5 // pred_check_branch
        %815 = sbr.rel (%p813) target = $region164
      $region163: #{_lambda_.2} parent=5 // pred_region
        %s816 = ssub.s32 %s9, 2
        // Predicated region
        $region165: #{_lambda_.2} parent=163 // pred_check
          %p817 = pneg %p115
        $region166: #{_lambda_.2} parent=163 // pred_check_branch
          %819 = sbr.rel (%p817) target = $region168
        $region167: #{_lambda_.2} parent=163 // pred_region
          %s820 = sand.u32 %s100, 1
          %s821 = sand.u32 %s100, 1
          %s822 = smul.addr %s821, 64
          %s823 = scalar_lea.vmem [#allocation4], %s822
        $region168: #{_lambda_.2} parent=163 // pred_fallthru
          _
      $region164: #{_lambda_.2} parent=5 // pred_fallthru
        _
    $region6: #{_lambda_.2} parent=1 // loop_footer
      %s13 = sadd.s32 1, %s9
    $region7: #{_lambda_.2} parent=1 // loop_footer_branch
      %8 = sbr.rel target = $region3
    $region8: #{_lambda_.2} parent=1 // loop_exit
      _

// kernel: _lambda_.3
$region0: #{_lambda_.3}
  #allocation0 [shape = 'u32[]', space=smem, size = 0x4, offset = 0x4, fixed_abs, tag = 'smem constant byte address 0x4 - core index']
  #allocation1 [shape = 'u32[144,128]{1,0:T(1,128)}', space=vmem, size = 0x12000, scoped, tag = 'internal scratch']
  #allocation2 [shape = 'f32[2,256]{1,0:T(2,128)}', space=vmem, size = 0x800, scoped, tag = 'scratch operand']
  %s0 = inlined_call_operand.vmem [shape: f32[2,8,8,16], index: 0, kind: input, shape index: {}]
  %s1 = inlined_call_operand.vmem [shape: f32[256,32], index: 1, kind: input, shape index: {}]
  %s2 = inlined_call_operand.hbm [shape: f32[2,32], index: 2, kind: output, shape index: {}]
  %s3 = sld [smem:[#allocation0]]
  $region87: #{_lambda_.3} parent=0
    _
  %s5 = ssub.s32 1, %s3
  %s6 = scalar_select 0, %s5, %s3
  $region1: #{_lambda_.3} parent=0
    #allocation3 [shape = 'u8[65536]{0}', space=vmem, size = 0x10000, scoped, tag = 'input window, operand 0']
    #allocation4 [shape = 'u8[1024]{0}', space=vmem, size = 0x400, scoped, tag = 'output window, operand 0, single buffered']
    #allocation5 [shape = 's32[2]{0}', space=sflag, size = 0x8, scoped, tag = 'scoped memory for _lambda_.3']
    %7 = vsyncpa [#allocation5], 0
    loop: start=0, step=1, limit=4
    $region2: #{_lambda_.3} parent=1 // loop_pre_header
      _
    $region3: #{_lambda_.3} parent=1 // loop_header
      %s9 = sphi 0, %s13
      %p10 = scmp.ge.s32.totalorder %s9, 4
      %s19 = sphi 0, %s21
      %s22 = sphi 0, %s19
      %s23 = sphi 0, %s22
      %s39 = sphi 0, %s23
      %s43 = sphi 0, %s43
      %s45 = sphi 0, %s43
      %s46 = sphi 0, %s45
      %s60 = sphi 0, %s46
      %s64 = sphi 0, %s64
      %s66 = sphi 0, %s64
      %s67 = sphi 0, %s66
      %s81 = sphi 0, %s67
    $region4: #{_lambda_.3} parent=1 // loop_header_branch
      %12 = sbr.rel (%p10) target = $region8
    $region5: #{_lambda_.3} parent=1 // loop_body
      %s14 = ssub.s32 %s9, 1
      %s15 = ssub.s32 %s9, 2
      %s16 = sadd.s32 %s9, 1
      %s17 = ssub.s32 %s9, %s16
      %p18 = scmp.eq.s32.totalorder %s17, 0
      %s20 = sadd.s32 %s19, 1
      %s21 = scalar_select %p18, %s19, %s20
      %p24 = pneg %p18
      %p25 = scmp.eq.s32.totalorder %s9, 1
      %p26 = por %p24, %p25
      %p27 = scmp.ne.s32.totalorder %s19, %s22
      %p28 = scmp.eq.s32.totalorder %s9, 0
      %p29 = por %p27, %p28
      %p30 = scmp.ne.s32.totalorder %s19, %s22
      %p31 = scmp.eq.s32.totalorder %s14, 1
      %p32 = por %p30, %p31
      %p33 = scmp.ne.s32.totalorder %s22, %s23
      %p34 = scmp.eq.s32.totalorder %s14, 0
      %p35 = por %p33, %p34
      %p36 = scmp.ne.s32.totalorder %s22, %s23
      %p37 = scmp.eq.s32.totalorder %s15, 1
      %p38 = por %p36, %p37
      %p40 = scmp.ne.s32.totalorder %s23, %s39
      %p41 = scmp.eq.s32.totalorder %s15, 0
      %p42 = por %p40, %p41
      %s44 = sadd.s32 %s43, 1
      %p47 = scmp.eq.s32.totalorder %s9, 1
      %p48 = scmp.ne.s32.totalorder %s43, %s45
      %p49 = scmp.eq.s32.totalorder %s9, 0
      %p50 = por %p48, %p49
      %p51 = scmp.ne.s32.totalorder %s43, %s45
      %p52 = scmp.eq.s32.totalorder %s14, 1
      %p53 = por %p51, %p52
      %p54 = scmp.ne.s32.totalorder %s45, %s46
      %p55 = scmp.eq.s32.totalorder %s14, 0
      %p56 = por %p54, %p55
      %p57 = scmp.ne.s32.totalorder %s45, %s46
      %p58 = scmp.eq.s32.totalorder %s15, 1
      %p59 = por %p57, %p58
      %p61 = scmp.ne.s32.totalorder %s46, %s60
      %p62 = scmp.eq.s32.totalorder %s15, 0
      %p63 = por %p61, %p62
      %s65 = sadd.s32 %s64, 1
      %p68 = scmp.eq.s32.totalorder %s9, 1
      %p69 = scmp.ne.s32.totalorder %s64, %s66
      %p70 = scmp.eq.s32.totalorder %s9, 0
      %p71 = por %p69, %p70
      %p72 = scmp.ne.s32.totalorder %s64, %s66
      %p73 = scmp.eq.s32.totalorder %s14, 1
      %p74 = por %p72, %p73
      %p75 = scmp.ne.s32.totalorder %s66, %s67
      %p76 = scmp.eq.s32.totalorder %s14, 0
      %p77 = por %p75, %p76
      %p78 = scmp.ne.s32.totalorder %s66, %s67
      %p79 = scmp.eq.s32.totalorder %s15, 1
      %p80 = por %p78, %p79
      %p82 = scmp.ne.s32.totalorder %s67, %s81
      %p83 = scmp.eq.s32.totalorder %s15, 0
      %p84 = por %p82, %p83
      %p85 = scmp.le.s32.totalorder 1, %s9
      %p86 = scmp.lt.s32.totalorder %s9, 3
      %p87 = pnand %p85, %p86
      %p88 = pneg %p87
      // Predicated region
      $region9: #{_lambda_.3} parent=5 // pred_check
        _
      $region10: #{_lambda_.3} parent=5 // pred_check_branch
        %90 = sbr.rel (%p87) target = $region12
      $region11: #{_lambda_.3} parent=5 // pred_region
        %s91 = ssub.s32 %s9, 1
        // Predicated region
        $region13: #{_lambda_.3} parent=11 // pred_check
          %p92 = pneg %p56
        $region14: #{_lambda_.3} parent=11 // pred_check_branch
          %94 = sbr.rel (%p92) target = $region16
        $region15: #{_lambda_.3} parent=11 // pred_region
          _
        $region16: #{_lambda_.3} parent=11 // pred_fallthru
          _
      $region12: #{_lambda_.3} parent=5 // pred_fallthru
        _
      %p95 = scmp.lt.s32.totalorder %s9, 2
      // Predicated region
      $region17: #{_lambda_.3} parent=5 // pred_check
        %p96 = pneg %p95
      $region18: #{_lambda_.3} parent=5 // pred_check_branch
        %98 = sbr.rel (%p96) target = $region20
      $region19: #{_lambda_.3} parent=5 // pred_region
        // Predicated region
        $region21: #{_lambda_.3} parent=19 // pred_check
          %p99 = pneg %p29
        $region22: #{_lambda_.3} parent=19 // pred_check_branch
          %101 = sbr.rel (%p99) target = $region24
        $region23: #{_lambda_.3} parent=19 // pred_region
          %s102 = sand.u32 %s19, 1
          %s103 = sand.u32 %s19, 1
          %s104 = smul.addr %s103, 64
          %s105 = scalar_lea.vmem [#allocation3], %s104
          %s106 = smul.u32 4, %s9
          %s107 = smul.addr %s106, 8
          %s108 = scalar_lea.vmem %s0, %s107
          // Predicated region
          $region25: #{_lambda_.3} parent=23 // pred_check
            _
          $region26: #{_lambda_.3} parent=23 // pred_check_branch
            %110 = sbr.rel (0) target = $region28
          $region27: #{_lambda_.3} parent=23 // pred_region
            // Predicated region
            $region29: #{_lambda_.3} parent=27 // pred_check
              _
            $region30: #{_lambda_.3} parent=27 // pred_check_branch
              %112 = sbr.rel (0) target = $region32
            $region31: #{_lambda_.3} parent=27 // pred_region
              // Predicated region
              $region44: #{_lambda_.3} parent=31 // pred_check
                _
              $region45: #{_lambda_.3} parent=31 // pred_check_branch
                %142 = sbr.rel (0) target = $region47
              $region46: #{_lambda_.3} parent=31 // pred_region
                loop: start=0, step=1, limit=1
                $region48: #{_lambda_.3} parent=46 // loop_pre_header
                  _
                $region49: #{_lambda_.3} parent=46 // loop_header
                  %s144 = sphi 0, %s148
                  %p145 = scmp.ge.s32.totalorder %s144, 1
                  %s149 = sphi %s108, %s108
                  %s150 = sphi %s105, %s105
                $region50: #{_lambda_.3} parent=46 // loop_header_branch
                  %147 = sbr.rel (%p145) target = $region54
                $region51: #{_lambda_.3} parent=46 // loop_body
                  %v151 = vld [vmem:[%s149] sm:$0xff]
                  %152 = vst [vmem:[%s150] sm:$0xff] %v151
                  %v153 = vld [vmem:[%s149 + $0x8] sm:$0xff]
                  %154 = vst [vmem:[%s150 + $0x8] sm:$0xff] %v153
                  %v155 = vld [vmem:[%s149 + $0x10] sm:$0xff]
                  %156 = vst [vmem:[%s150 + $0x10] sm:$0xff] %v155
                  %v157 = vld [vmem:[%s149 + $0x18] sm:$0xff]
                  %158 = vst [vmem:[%s150 + $0x18] sm:$0xff] %v157
                  %v159 = vld [vmem:[%s149 + $0x40] sm:$0xff]
                  %160 = vst [vmem:[%s150 + $0x20] sm:$0xff] %v159
                  %v161 = vld [vmem:[%s149 + $0x48] sm:$0xff]
                  %162 = vst [vmem:[%s150 + $0x28] sm:$0xff] %v161
                  %v163 = vld [vmem:[%s149 + $0x50] sm:$0xff]
                  %164 = vst [vmem:[%s150 + $0x30] sm:$0xff] %v163
                  %v165 = vld [vmem:[%s149 + $0x58] sm:$0xff]
                  %166 = vst [vmem:[%s150 + $0x38] sm:$0xff] %v165
                $region52: #{_lambda_.3} parent=46 // loop_footer
                  %s148 = sadd.s32 1, %s144
                $region53: #{_lambda_.3} parent=46 // loop_footer_branch
                  %143 = sbr.rel target = $region49
                $region54: #{_lambda_.3} parent=46 // loop_exit
                  _
              $region47: #{_lambda_.3} parent=31 // pred_fallthru
                _
              // Predicated region
              $region55: #{_lambda_.3} parent=31 // pred_check
                _
              $region56: #{_lambda_.3} parent=31 // pred_check_branch
                %168 = sbr.rel target = $region58
              $region57: #{_lambda_.3} parent=31 // pred_region
                _
              $region58: #{_lambda_.3} parent=31 // pred_fallthru
                _
            $region32: #{_lambda_.3} parent=27 // pred_fallthru
              _
            // Predicated region
            $region33: #{_lambda_.3} parent=27 // pred_check
              _
            $region34: #{_lambda_.3} parent=27 // pred_check_branch
              %114 = sbr.rel target = $region36
            $region35: #{_lambda_.3} parent=27 // pred_region
              %s116 = ssub.s32 256, 1
              loop: start=0, step=1, limit=1
              $region37: #{_lambda_.3} parent=35 // loop_pre_header
                _
              $region38: #{_lambda_.3} parent=35 // loop_header
                %s118 = sphi 0, %s122
                %p119 = scmp.ge.s32.totalorder %s118, 1
                %s123 = sphi %s108, %s108
                %s124 = sphi %s105, %s105
              $region39: #{_lambda_.3} parent=35 // loop_header_branch
                %121 = sbr.rel (%p119) target = $region43
              $region40: #{_lambda_.3} parent=35 // loop_body
                %v125 = vld [vmem:[%s123] sm:%s116]
                %126 = vst [vmem:[%s124] sm:%s116] %v125
                %v127 = vld [vmem:[%s123 + $0x8] sm:%s116]
                %128 = vst [vmem:[%s124 + $0x8] sm:%s116] %v127
                %v129 = vld [vmem:[%s123 + $0x10] sm:%s116]
                %130 = vst [vmem:[%s124 + $0x10] sm:%s116] %v129
                %v131 = vld [vmem:[%s123 + $0x18] sm:%s116]
                %132 = vst [vmem:[%s124 + $0x18] sm:%s116] %v131
                %v133 = vld [vmem:[%s123 + $0x40] sm:%s116]
                %134 = vst [vmem:[%s124 + $0x20] sm:%s116] %v133
                %v135 = vld [vmem:[%s123 + $0x48] sm:%s116]
                %136 = vst [vmem:[%s124 + $0x28] sm:%s116] %v135
                %v137 = vld [vmem:[%s123 + $0x50] sm:%s116]
                %138 = vst [vmem:[%s124 + $0x30] sm:%s116] %v137
                %v139 = vld [vmem:[%s123 + $0x58] sm:%s116]
                %140 = vst [vmem:[%s124 + $0x38] sm:%s116] %v139
              $region41: #{_lambda_.3} parent=35 // loop_footer
                %s122 = sadd.s32 1, %s118
              $region42: #{_lambda_.3} parent=35 // loop_footer_branch
                %117 = sbr.rel target = $region38
              $region43: #{_lambda_.3} parent=35 // loop_exit
                _
            $region36: #{_lambda_.3} parent=27 // pred_fallthru
              _
          $region28: #{_lambda_.3} parent=23 // pred_fallthru
            _
          %169 = vnop
        $region24: #{_lambda_.3} parent=19 // pred_fallthru
          _
      $region20: #{_lambda_.3} parent=5 // pred_fallthru
        _
      %p170 = scmp.le.s32.totalorder 1, %s9
      %p171 = scmp.lt.s32.totalorder %s9, 3
      %p172 = pnand %p170, %p171
      %p173 = pneg %p172
      // Predicated region
      $region59: #{_lambda_.3} parent=5 // pred_check
        _
      $region60: #{_lambda_.3} parent=5 // pred_check_branch
        %175 = sbr.rel (%p172) target = $region62
      $region61: #{_lambda_.3} parent=5 // pred_region
        %s176 = ssub.s32 %s9, 1
        %s177 = sand.u32 %s22, 1
        %s178 = sand.u32 %s22, 1
        %s179 = smul.addr %s178, 64
        %s180 = scalar_lea.vmem [#allocation3], %s179
        // Predicated region
        $region63: #{_lambda_.3} parent=61 // pred_check
          %p181 = pneg %p35
        $region64: #{_lambda_.3} parent=61 // pred_check_branch
          %183 = sbr.rel (%p181) target = $region66
        $region65: #{_lambda_.3} parent=61 // pred_region
          _
        $region66: #{_lambda_.3} parent=61 // pred_fallthru
          _
        %s184 = sand.u32 %s22, 1
        %s185 = sand.u32 %s22, 1
        %s186 = smul.addr %s185, 64
        %s187 = scalar_lea.vmem [#allocation3], %s186
        %p188 = pneg %p35
        %p189 = pneg %p32
        %p190 = pneg %p56
        %p191 = pneg %p53
        %p192 = pneg %p77
        %p193 = pneg %p74
        %s194 = smul.u32 4, %s14
        %p195 = scmp.eq.s32.totalorder %s14, 0
        // Predicated region
        $region67: #{_lambda_.3} parent=61 // pred_check
          %p196 = pneg %p195
        $region68: #{_lambda_.3} parent=61 // pred_check_branch
          %198 = sbr.rel (%p196) target = $region70
        $region69: #{_lambda_.3} parent=61 // pred_region
          %199 = vst [vmem:[#allocation2] sm:$0xf] 0.0
        $region70: #{_lambda_.3} parent=61 // pred_fallthru
          _
        %v200 = vld [vmem:[%s180] sm:$0xff]
        %v201 = vld [vmem:[%s180 + $0x8] sm:$0xff]
        %v202 = vld [vmem:[%s180 + $0x10] sm:$0xff]
        %v203 = vld [vmem:[%s180 + $0x18] sm:$0xff]
        %v204 = vld [vmem:[%s180 + $0x20] sm:$0xff]
        %v205 = vld [vmem:[%s180 + $0x28] sm:$0xff]
        %v206 = vld [vmem:[%s180 + $0x30] sm:$0xff]
        %v207 = vld [vmem:[%s180 + $0x38] sm:$0xff]
        %vm208 = vcmp.ge.f32.partialorder %v200, 0.0
        %vm209 = vcmp.ge.f32.partialorder %v201, 0.0
        %vm210 = vcmp.ge.f32.partialorder %v202, 0.0
        %vm211 = vcmp.ge.f32.partialorder %v203, 0.0
        %vm212 = vcmp.ge.f32.partialorder %v204, 0.0
        %vm213 = vcmp.ge.f32.partialorder %v205, 0.0
        %vm214 = vcmp.ge.f32.partialorder %v206, 0.0
        %vm215 = vcmp.ge.f32.partialorder %v207, 0.0
        %v216 = vmul.f32 %v200, 0.2
        %v217 = vmul.f32 %v201, 0.2
        %v218 = vmul.f32 %v202, 0.2
        %v219 = vmul.f32 %v203, 0.2
        %v220 = vmul.f32 %v204, 0.2
        %v221 = vmul.f32 %v205, 0.2
        %v222 = vmul.f32 %v206, 0.2
        %v223 = vmul.f32 %v207, 0.2
        %v224 = vsel %vm208, %v200, %v216
        %v225 = vsel %vm209, %v201, %v217
        %v226 = vsel %vm210, %v202, %v218
        %v227 = vsel %vm211, %v203, %v219
        %v228 = vsel %vm212, %v204, %v220
        %v229 = vsel %vm213, %v205, %v221
        %v230 = vsel %vm214, %v206, %v222
        %v231 = vsel %vm215, %v207, %v223
        %s232 = smul.u32 %s14, 4
        %v233 = vstv %s232
        %v234 = vadd.s32 %v233, 1
        %v235 = vadd.s32 %v233, 2
        %v236 = vadd.s32 %v233, 3
        %vm237 = vcmp.ge.s32.totalorder %v233, 4294967295
        %vm238 = vcmp.ge.s32.totalorder %v234, 4294967295
        %vm239 = vcmp.ge.s32.totalorder %v235, 4294967295
        %vm240 = vcmp.ge.s32.totalorder %v236, 4294967295
        %vm241 = vcmp.le.s32.totalorder %v233, 5
        %vm242 = vcmp.le.s32.totalorder %v234, 5
        %vm243 = vcmp.le.s32.totalorder %v235, 5
        %vm244 = vcmp.le.s32.totalorder %v236, 5
        %vm245 = vmand %vm237, %vm241
        %vm246 = vmand %vm238, %vm242
        %vm247 = vmand %vm239, %vm243
        %vm248 = vmand %vm240, %vm244
        %v249 = vsel %vm245, 1, 0
        %v250 = vsel %vm246, 1, 0
        %v251 = vsel %vm247, 1, 0
        %v252 = vsel %vm248, 1, 0
        %vm253 = vcmp.eq.s32.totalorder %v249, 1
        %vm254 = vcmp.eq.s32.totalorder %v250, 1
        %vm255 = vcmp.eq.s32.totalorder %v251, 1
        %vm256 = vcmp.eq.s32.totalorder %v252, 1
        %v257 = vsel %vm253, %v224, 0.0
        %v258 = vsel %vm254, %v225, 0.0
        %v259 = vsel %vm255, %v226, 0.0
        %v260 = vsel %vm256, %v227, 0.0
        %v261 = vsel %vm253, %v228, 0.0
        %v262 = vsel %vm254, %v229, 0.0
        %v263 = vsel %vm255, %v230, 0.0
        %v264 = vsel %vm256, %v231, 0.0
        %vm265 = vcmask 130048
        %v266 = vsel %vm265, %v257, 0.0
        %v267 = vsel %vm265, %v258, 0.0
        %v268 = vadd.f32 %v266, %v267
        %v269 = vsel %vm265, %v259, 0.0
        %v270 = vadd.f32 %v268, %v269
        %v271 = vsel %vm265, %v260, 0.0
        %v272 = vadd.f32 %v270, %v271
        %v273 = vsel %vm265, %v261, 0.0
        %v274 = vsel %vm265, %v262, 0.0
        %v275 = vadd.f32 %v273, %v274
        %v276 = vsel %vm265, %v263, 0.0
        %v277 = vadd.f32 %v275, %v276
        %v278 = vsel %vm265, %v264, 0.0
        %v279 = vadd.f32 %v277, %v278
        %vm280 = vcmask 128000
        %v281 = vsel %vm280, %v272, 0.0
        %v282 = vrot.slane %v281, 4
        %v283 = vadd.f32 %v281, %v282
        %v284 = vrot.slane %v283, 2
        %v285 = vadd.f32 %v283, %v284
        %v286 = vrot.slane %v285, 1
        %v287 = vadd.f32 %v285, %v286
        %v288 = vsel %vm280, %v279, 0.0
        %v289 = vrot.slane %v288, 4
        %v290 = vadd.f32 %v288, %v289
        %v291 = vrot.slane %v290, 2
        %v292 = vadd.f32 %v290, %v291
        %v293 = vrot.slane %v292, 1
        %v294 = vadd.f32 %v292, %v293
        %vm295 = vcmask 129024
        %v296 = vsel %vm295, %v272, 0.0
        %v297 = vrot.slane %v296, 4
        %v298 = vadd.f32 %v296, %v297
        %v299 = vrot.slane %v298, 2
        %v300 = vadd.f32 %v298, %v299
        %v301 = vrot.slane %v300, 1
        %v302 = vadd.f32 %v300, %v301
        %v303 = vsel %vm295, %v279, 0.0
        %v304 = vrot.slane %v303, 4
        %v305 = vadd.f32 %v303, %v304
        %v306 = vrot.slane %v305, 2
        %v307 = vadd.f32 %v305, %v306
        %v308 = vrot.slane %v307, 1
        %v309 = vadd.f32 %v307, %v308
        %v312 = vrot.slane %v272, 1
        %v313 = vrot.slane %v279, 1
        %v316 = vsel %vm295, %v312, 0.0
        %v317 = vrot.slane %v316, 4
        %v318 = vadd.f32 %v316, %v317
        %v319 = vrot.slane %v318, 2
        %v320 = vadd.f32 %v318, %v319
        %v321 = vrot.slane %v320, 1
        %v322 = vadd.f32 %v320, %v321
        %v323 = vsel %vm295, %v313, 0.0
        %v324 = vrot.slane %v323, 4
        %v325 = vadd.f32 %v323, %v324
        %v326 = vrot.slane %v325, 2
        %v327 = vadd.f32 %v325, %v326
        %v328 = vrot.slane %v327, 1
        %v329 = vadd.f32 %v327, %v328
        %v330 = vrot.slane %v272, 2
        %v331 = vrot.slane %v279, 2
        %v334 = vsel %vm280, %v330, 0.0
        %v335 = vrot.slane %v334, 4
        %v336 = vadd.f32 %v334, %v335
        %v337 = vrot.slane %v336, 2
        %v338 = vadd.f32 %v336, %v337
        %v339 = vrot.slane %v338, 1
        %v340 = vadd.f32 %v338, %v339
        %v341 = vsel %vm280, %v331, 0.0
        %v342 = vrot.slane %v341, 4
        %v343 = vadd.f32 %v341, %v342
        %v344 = vrot.slane %v343, 2
        %v345 = vadd.f32 %v343, %v344
        %v346 = vrot.slane %v345, 1
        %v347 = vadd.f32 %v345, %v346
        %vm348 = vcmp.ge.s32.totalorder %v233, 0
        %vm349 = vcmp.ge.s32.totalorder %v234, 0
        %vm350 = vcmp.ge.s32.totalorder %v235, 0
        %vm351 = vcmp.ge.s32.totalorder %v236, 0
        %vm352 = vcmp.le.s32.totalorder %v233, 6
        %vm353 = vcmp.le.s32.totalorder %v234, 6
        %vm354 = vcmp.le.s32.totalorder %v235, 6
        %vm355 = vcmp.le.s32.totalorder %v236, 6
        %vm356 = vmand %vm348, %vm352
        %vm357 = vmand %vm349, %vm353
        %vm358 = vmand %vm350, %vm354
        %vm359 = vmand %vm351, %vm355
        %v360 = vsel %vm356, 1, 0
        %v361 = vsel %vm357, 1, 0
        %v362 = vsel %vm358, 1, 0
        %v363 = vsel %vm359, 1, 0
        %vm364 = vcmp.eq.s32.totalorder %v360, 1
        %vm365 = vcmp.eq.s32.totalorder %v361, 1
        %vm366 = vcmp.eq.s32.totalorder %v362, 1
        %vm367 = vcmp.eq.s32.totalorder %v363, 1
        %v368 = vsel %vm364, %v224, 0.0
        %v369 = vsel %vm365, %v225, 0.0
        %v370 = vsel %vm366, %v226, 0.0
        %v371 = vsel %vm367, %v227, 0.0
        %v372 = vsel %vm364, %v228, 0.0
        %v373 = vsel %vm365, %v229, 0.0
        %v374 = vsel %vm366, %v230, 0.0
        %v375 = vsel %vm367, %v231, 0.0
        %v376 = vsel %vm265, %v368, 0.0
        %v377 = vsel %vm265, %v369, 0.0
        %v378 = vadd.f32 %v376, %v377
        %v379 = vsel %vm265, %v370, 0.0
        %v380 = vadd.f32 %v378, %v379
        %v381 = vsel %vm265, %v371, 0.0
        %v382 = vadd.f32 %v380, %v381
        %v383 = vsel %vm265, %v372, 0.0
        %v384 = vsel %vm265, %v373, 0.0
        %v385 = vadd.f32 %v383, %v384
        %v386 = vsel %vm265, %v374, 0.0
        %v387 = vadd.f32 %v385, %v386
        %v388 = vsel %vm265, %v375, 0.0
        %v389 = vadd.f32 %v387, %v388
        %v390 = vsel %vm280, %v382, 0.0
        %v391 = vrot.slane %v390, 4
        %v392 = vadd.f32 %v390, %v391
        %v393 = vrot.slane %v392, 2
        %v394 = vadd.f32 %v392, %v393
        %v395 = vrot.slane %v394, 1
        %v396 = vadd.f32 %v394, %v395
        %v397 = vsel %vm280, %v389, 0.0
        %v398 = vrot.slane %v397, 4
        %v399 = vadd.f32 %v397, %v398
        %v400 = vrot.slane %v399, 2
        %v401 = vadd.f32 %v399, %v400
        %v402 = vrot.slane %v401, 1
        %v403 = vadd.f32 %v401, %v402
        %v404 = vsel %vm295, %v382, 0.0
        %v405 = vrot.slane %v404, 4
        %v406 = vadd.f32 %v404, %v405
        %v407 = vrot.slane %v406, 2
        %v408 = vadd.f32 %v406, %v407
        %v409 = vrot.slane %v408, 1
        %v410 = vadd.f32 %v408, %v409
        %v411 = vsel %vm295, %v389, 0.0
        %v412 = vrot.slane %v411, 4
        %v413 = vadd.f32 %v411, %v412
        %v414 = vrot.slane %v413, 2
        %v415 = vadd.f32 %v413, %v414
        %v416 = vrot.slane %v415, 1
        %v417 = vadd.f32 %v415, %v416
        %v420 = vrot.slane %v382, 1
        %v421 = vrot.slane %v389, 1
        %v424 = vsel %vm295, %v420, 0.0
        %v425 = vrot.slane %v424, 4
        %v426 = vadd.f32 %v424, %v425
        %v427 = vrot.slane %v426, 2
        %v428 = vadd.f32 %v426, %v427
        %v429 = vrot.slane %v428, 1
        %v430 = vadd.f32 %v428, %v429
        %v431 = vsel %vm295, %v421, 0.0
        %v432 = vrot.slane %v431, 4
        %v433 = vadd.f32 %v431, %v432
        %v434 = vrot.slane %v433, 2
        %v435 = vadd.f32 %v433, %v434
        %v436 = vrot.slane %v435, 1
        %v437 = vadd.f32 %v435, %v436
        %v438 = vrot.slane %v382, 2
        %v439 = vrot.slane %v389, 2
        %v442 = vsel %vm280, %v438, 0.0
        %v443 = vrot.slane %v442, 4
        %v444 = vadd.f32 %v442, %v443
        %v445 = vrot.slane %v444, 2
        %v446 = vadd.f32 %v444, %v445
        %v447 = vrot.slane %v446, 1
        %v448 = vadd.f32 %v446, %v447
        %v449 = vsel %vm280, %v439, 0.0
        %v450 = vrot.slane %v449, 4
        %v451 = vadd.f32 %v449, %v450
        %v452 = vrot.slane %v451, 2
        %v453 = vadd.f32 %v451, %v452
        %v454 = vrot.slane %v453, 1
        %v455 = vadd.f32 %v453, %v454
        %vm456 = vcmp.ge.s32.totalorder %v233, 1
        %vm457 = vcmp.ge.s32.totalorder %v234, 1
        %vm458 = vcmp.ge.s32.totalorder %v235, 1
        %vm459 = vcmp.ge.s32.totalorder %v236, 1
        %vm460 = vcmp.le.s32.totalorder %v233, 7
        %vm461 = vcmp.le.s32.totalorder %v234, 7
        %vm462 = vcmp.le.s32.totalorder %v235, 7
        %vm463 = vcmp.le.s32.totalorder %v236, 7
        %vm464 = vmand %vm456, %vm460
        %vm465 = vmand %vm457, %vm461
        %vm466 = vmand %vm458, %vm462
        %vm467 = vmand %vm459, %vm463
        %v468 = vsel %vm464, 1, 0
        %v469 = vsel %vm465, 1, 0
        %v470 = vsel %vm466, 1, 0
        %v471 = vsel %vm467, 1, 0
        %vm472 = vcmp.eq.s32.totalorder %v468, 1
        %vm473 = vcmp.eq.s32.totalorder %v469, 1
        %vm474 = vcmp.eq.s32.totalorder %v470, 1
        %vm475 = vcmp.eq.s32.totalorder %v471, 1
        %v476 = vsel %vm472, %v224, 0.0
        %v477 = vsel %vm473, %v225, 0.0
        %v478 = vsel %vm474, %v226, 0.0
        %v479 = vsel %vm475, %v227, 0.0
        %v480 = vsel %vm472, %v228, 0.0
        %v481 = vsel %vm473, %v229, 0.0
        %v482 = vsel %vm474, %v230, 0.0
        %v483 = vsel %vm475, %v231, 0.0
        %v484 = vsel %vm265, %v476, 0.0
        %v485 = vsel %vm265, %v477, 0.0
        %v486 = vadd.f32 %v484, %v485
        %v487 = vsel %vm265, %v478, 0.0
        %v488 = vadd.f32 %v486, %v487
        %v489 = vsel %vm265, %v479, 0.0
        %v490 = vadd.f32 %v488, %v489
        %v491 = vsel %vm265, %v480, 0.0
        %v492 = vsel %vm265, %v481, 0.0
        %v493 = vadd.f32 %v491, %v492
        %v494 = vsel %vm265, %v482, 0.0
        %v495 = vadd.f32 %v493, %v494
        %v496 = vsel %vm265, %v483, 0.0
        %v497 = vadd.f32 %v495, %v496
        %v498 = vsel %vm280, %v490, 0.0
        %v499 = vrot.slane %v498, 4
        %v500 = vadd.f32 %v498, %v499
        %v501 = vrot.slane %v500, 2
        %v502 = vadd.f32 %v500, %v501
        %v503 = vrot.slane %v502, 1
        %v504 = vadd.f32 %v502, %v503
        %v505 = vsel %vm280, %v497, 0.0
        %v506 = vrot.slane %v505, 4
        %v507 = vadd.f32 %v505, %v506
        %v508 = vrot.slane %v507, 2
        %v509 = vadd.f32 %v507, %v508
        %v510 = vrot.slane %v509, 1
        %v511 = vadd.f32 %v509, %v510
        %v512 = vsel %vm295, %v490, 0.0
        %v513 = vrot.slane %v512, 4
        %v514 = vadd.f32 %v512, %v513
        %v515 = vrot.slane %v514, 2
        %v516 = vadd.f32 %v514, %v515
        %v517 = vrot.slane %v516, 1
        %v518 = vadd.f32 %v516, %v517
        %v519 = vsel %vm295, %v497, 0.0
        %v520 = vrot.slane %v519, 4
        %v521 = vadd.f32 %v519, %v520
        %v522 = vrot.slane %v521, 2
        %v523 = vadd.f32 %v521, %v522
        %v524 = vrot.slane %v523, 1
        %v525 = vadd.f32 %v523, %v524
        %v528 = vrot.slane %v490, 1
        %v529 = vrot.slane %v497, 1
        %v532 = vsel %vm295, %v528, 0.0
        %v533 = vrot.slane %v532, 4
        %v534 = vadd.f32 %v532, %v533
        %v535 = vrot.slane %v534, 2
        %v536 = vadd.f32 %v534, %v535
        %v537 = vrot.slane %v536, 1
        %v538 = vadd.f32 %v536, %v537
        %v539 = vsel %vm295, %v529, 0.0
        %v540 = vrot.slane %v539, 4
        %v541 = vadd.f32 %v539, %v540
        %v542 = vrot.slane %v541, 2
        %v543 = vadd.f32 %v541, %v542
        %v544 = vrot.slane %v543, 1
        %v545 = vadd.f32 %v543, %v544
        %v546 = vrot.slane %v490, 2
        %v547 = vrot.slane %v497, 2
        %v550 = vsel %vm280, %v546, 0.0
        %v551 = vrot.slane %v550, 4
        %v552 = vadd.f32 %v550, %v551
        %v553 = vrot.slane %v552, 2
        %v554 = vadd.f32 %v552, %v553
        %v555 = vrot.slane %v554, 1
        %v556 = vadd.f32 %v554, %v555
        %v557 = vsel %vm280, %v547, 0.0
        %v558 = vrot.slane %v557, 4
        %v559 = vadd.f32 %v557, %v558
        %v560 = vrot.slane %v559, 2
        %v561 = vadd.f32 %v559, %v560
        %v562 = vrot.slane %v561, 1
        %v563 = vadd.f32 %v561, %v562
        %vm564 = vcmp.ge.s32.totalorder %v233, 2
        %vm565 = vcmp.ge.s32.totalorder %v234, 2
        %vm566 = vcmp.ge.s32.totalorder %v235, 2
        %vm567 = vcmp.ge.s32.totalorder %v236, 2
        %vm568 = vcmp.le.s32.totalorder %v233, 8
        %vm569 = vcmp.le.s32.totalorder %v234, 8
        %vm570 = vcmp.le.s32.totalorder %v235, 8
        %vm571 = vcmp.le.s32.totalorder %v236, 8
        %vm572 = vmand %vm564, %vm568
        %vm573 = vmand %vm565, %vm569
        %vm574 = vmand %vm566, %vm570
        %vm575 = vmand %vm567, %vm571
        %v576 = vsel %vm572, 1, 0
        %v577 = vsel %vm573, 1, 0
        %v578 = vsel %vm574, 1, 0
        %v579 = vsel %vm575, 1, 0
        %vm580 = vcmp.eq.s32.totalorder %v576, 1
        %vm581 = vcmp.eq.s32.totalorder %v577, 1
        %vm582 = vcmp.eq.s32.totalorder %v578, 1
        %vm583 = vcmp.eq.s32.totalorder %v579, 1
        %v584 = vsel %vm580, %v224, 0.0
        %v585 = vsel %vm581, %v225, 0.0
        %v586 = vsel %vm582, %v226, 0.0
        %v587 = vsel %vm583, %v227, 0.0
        %v588 = vsel %vm580, %v228, 0.0
        %v589 = vsel %vm581, %v229, 0.0
        %v590 = vsel %vm582, %v230, 0.0
        %v591 = vsel %vm583, %v231, 0.0
        %v592 = vsel %vm265, %v584, 0.0
        %v593 = vsel %vm265, %v585, 0.0
        %v594 = vadd.f32 %v592, %v593
        %v595 = vsel %vm265, %v586, 0.0
        %v596 = vadd.f32 %v594, %v595
        %v597 = vsel %vm265, %v587, 0.0
        %v598 = vadd.f32 %v596, %v597
        %v599 = vsel %vm265, %v588, 0.0
        %v600 = vsel %vm265, %v589, 0.0
        %v601 = vadd.f32 %v599, %v600
        %v602 = vsel %vm265, %v590, 0.0
        %v603 = vadd.f32 %v601, %v602
        %v604 = vsel %vm265, %v591, 0.0
        %v605 = vadd.f32 %v603, %v604
        %v606 = vsel %vm280, %v598, 0.0
        %v607 = vrot.slane %v606, 4
        %v608 = vadd.f32 %v606, %v607
        %v609 = vrot.slane %v608, 2
        %v610 = vadd.f32 %v608, %v609
        %v611 = vrot.slane %v610, 1
        %v612 = vadd.f32 %v610, %v611
        %v613 = vsel %vm280, %v605, 0.0
        %v614 = vrot.slane %v613, 4
        %v615 = vadd.f32 %v613, %v614
        %v616 = vrot.slane %v615, 2
        %v617 = vadd.f32 %v615, %v616
        %v618 = vrot.slane %v617, 1
        %v619 = vadd.f32 %v617, %v618
        %v620 = vsel %vm295, %v598, 0.0
        %v621 = vrot.slane %v620, 4
        %v622 = vadd.f32 %v620, %v621
        %v623 = vrot.slane %v622, 2
        %v624 = vadd.f32 %v622, %v623
        %v625 = vrot.slane %v624, 1
        %v626 = vadd.f32 %v624, %v625
        %v627 = vsel %vm295, %v605, 0.0
        %v628 = vrot.slane %v627, 4
        %v629 = vadd.f32 %v627, %v628
        %v630 = vrot.slane %v629, 2
        %v631 = vadd.f32 %v629, %v630
        %v632 = vrot.slane %v631, 1
        %v633 = vadd.f32 %v631, %v632
        %v636 = vrot.slane %v598, 1
        %v637 = vrot.slane %v605, 1
        %v640 = vsel %vm295, %v636, 0.0
        %v641 = vrot.slane %v640, 4
        %v642 = vadd.f32 %v640, %v641
        %v643 = vrot.slane %v642, 2
        %v644 = vadd.f32 %v642, %v643
        %v645 = vrot.slane %v644, 1
        %v646 = vadd.f32 %v644, %v645
        %v647 = vsel %vm295, %v637, 0.0
        %v648 = vrot.slane %v647, 4
        %v649 = vadd.f32 %v647, %v648
        %v650 = vrot.slane %v649, 2
        %v651 = vadd.f32 %v649, %v650
        %v652 = vrot.slane %v651, 1
        %v653 = vadd.f32 %v651, %v652
        %v654 = vrot.slane %v598, 2
        %v655 = vrot.slane %v605, 2
        %v658 = vsel %vm280, %v654, 0.0
        %v659 = vrot.slane %v658, 4
        %v660 = vadd.f32 %v658, %v659
        %v661 = vrot.slane %v660, 2
        %v662 = vadd.f32 %v660, %v661
        %v663 = vrot.slane %v662, 1
        %v664 = vadd.f32 %v662, %v663
        %v665 = vsel %vm280, %v655, 0.0
        %v666 = vrot.slane %v665, 4
        %v667 = vadd.f32 %v665, %v666
        %v668 = vrot.slane %v667, 2
        %v669 = vadd.f32 %v667, %v668
        %v670 = vrot.slane %v669, 1
        %v671 = vadd.f32 %v669, %v670
        %v672 = vld [vmem:[#allocation2] sm:$0xf]
        %vm675 = vcmask 1041409
        %v676 = vsel %vm675, %v294, %v287
        %v680 = vsel %vm675, %v309, %v302
        %681 = vrot.lane.b32.xlu0 %v680, 16
        %v682 = vpop.permute.xlu0 %681
        %v686 = vsel %vm675, %v329, %v322
        %687 = vrot.lane.b32.xlu0 %v686, 32
        %v688 = vpop.permute.xlu0 %687
        %v692 = vsel %vm675, %v347, %v340
        %693 = vrot.lane.b32.xlu0 %v692, 48
        %v694 = vpop.permute.xlu0 %693
        %v698 = vsel %vm675, %v403, %v396
        %699 = vrot.lane.b32.xlu0 %v698, 64
        %v700 = vpop.permute.xlu0 %699
        %v704 = vsel %vm675, %v417, %v410
        %705 = vrot.lane.b32.xlu0 %v704, 80
        %v706 = vpop.permute.xlu0 %705
        %v710 = vsel %vm675, %v437, %v430
        %711 = vrot.lane.b32.xlu0 %v710, 96
        %v712 = vpop.permute.xlu0 %711
        %v716 = vsel %vm675, %v455, %v448
        %717 = vrot.lane.b32.xlu0 %v716, 112
        %v718 = vpop.permute.xlu0 %717
        %v722 = vsel %vm675, %v511, %v504
        %v726 = vsel %vm675, %v525, %v518
        %727 = vrot.lane.b32.xlu0 %v726, 16
        %v728 = vpop.permute.xlu0 %727
        %v732 = vsel %vm675, %v545, %v538
        %733 = vrot.lane.b32.xlu0 %v732, 32
        %v734 = vpop.permute.xlu0 %733
        %v738 = vsel %vm675, %v563, %v556
        %739 = vrot.lane.b32.xlu0 %v738, 48
        %v740 = vpop.permute.xlu0 %739
        %v744 = vsel %vm675, %v619, %v612
        %745 = vrot.lane.b32.xlu0 %v744, 64
        %v746 = vpop.permute.xlu0 %745
        %v750 = vsel %vm675, %v633, %v626
        %751 = vrot.lane.b32.xlu0 %v750, 80
        %v752 = vpop.permute.xlu0 %751
        %v756 = vsel %vm675, %v653, %v646
        %757 = vrot.lane.b32.xlu0 %v756, 96
        %v758 = vpop.permute.xlu0 %757
        %v762 = vsel %vm675, %v671, %v664
        %763 = vrot.lane.b32.xlu0 %v762, 112
        %v764 = vpop.permute.xlu0 %763
        %v766 = vsel %vm265, %v676, %v682
        %vm767 = vcmask 261120
        %v768 = vsel %vm767, %v766, %v688
        %vm769 = vcmask 392192
        %v770 = vsel %vm769, %v768, %v694
        %vm771 = vcmask 523264
        %v772 = vsel %vm771, %v770, %v700
        %vm773 = vcmask 654336
        %v774 = vsel %vm773, %v772, %v706
        %vm775 = vcmask 785408
        %v776 = vsel %vm775, %v774, %v712
        %vm777 = vcmask 916480
        %v778 = vsel %vm777, %v776, %v718
        %v779 = vsel %vm265, %v722, %v728
        %v780 = vsel %vm767, %v779, %v734
        %v781 = vsel %vm769, %v780, %v740
        %v782 = vsel %vm771, %v781, %v746
        %v783 = vsel %vm773, %v782, %v752
        %v784 = vsel %vm775, %v783, %v758
        %v785 = vsel %vm777, %v784, %v764
        %v788 = vcombine.low %v778, %v785
        %v790 = vunpack.c.l.s4 1983009808
        %v791 = vunpack.c.0.s8 %v790
        %v792 = vlaneseq
        %v793 = vshrl.u32 %v792, 7
        %v794 = vsub.s32 %v791, %v793
        %v795 = vrot.slane %v788, %v794
        %v797 = vadd.f32 %v672, %v795
        %798 = vst [vmem:[#allocation2] sm:$0xf] %v797
        %p799 = scmp.eq.s32.totalorder %s14, 1
        // Predicated region
        $region71: #{_lambda_.3} parent=61 // pred_check
          %p800 = pneg %p799
        $region72: #{_lambda_.3} parent=61 // pred_check_branch
          %802 = sbr.rel (%p800) target = $region74
        $region73: #{_lambda_.3} parent=61 // pred_region
          %v803 = vld [vmem:[#allocation2] sm:$0xf]
          %v804 = vmul.f32 %v803, 0.020408163
          %v805 = vld [vmem:[%s1] sm:$0xff]
          %v806 = vld [vmem:[%s1 + $0x8] sm:$0xff]
          %v807 = vld [vmem:[%s1 + $0x10] sm:$0xff]
          %v808 = vld [vmem:[%s1 + $0x18] sm:$0xff]
          %v809 = vld [vmem:[%s1 + $0x20] sm:$0xff]
          %v810 = vld [vmem:[%s1 + $0x28] sm:$0xff]
          %v811 = vld [vmem:[%s1 + $0x30] sm:$0xff]
          %v812 = vld [vmem:[%s1 + $0x38] sm:$0xff]
          %v813 = vld [vmem:[%s1 + $0x40] sm:$0xff]
          %v814 = vld [vmem:[%s1 + $0x48] sm:$0xff]
          %v815 = vld [vmem:[%s1 + $0x50] sm:$0xff]
          %v816 = vld [vmem:[%s1 + $0x58] sm:$0xff]
          %v817 = vld [vmem:[%s1 + $0x60] sm:$0xff]
          %v818 = vld [vmem:[%s1 + $0x68] sm:$0xff]
          %v819 = vld [vmem:[%s1 + $0x70] sm:$0xff]
          %v820 = vld [vmem:[%s1 + $0x78] sm:$0xff]
          %v821 = vld [vmem:[%s1 + $0x80] sm:$0xff]
          %v822 = vld [vmem:[%s1 + $0x88] sm:$0xff]
          %v823 = vld [vmem:[%s1 + $0x90] sm:$0xff]
          %v824 = vld [vmem:[%s1 + $0x98] sm:$0xff]
          %v825 = vld [vmem:[%s1 + $0xa0] sm:$0xff]
          %v826 = vld [vmem:[%s1 + $0xa8] sm:$0xff]
          %v827 = vld [vmem:[%s1 + $0xb0] sm:$0xff]
          %v828 = vld [vmem:[%s1 + $0xb8] sm:$0xff]
          %v829 = vld [vmem:[%s1 + $0xc0] sm:$0xff]
          %v830 = vld [vmem:[%s1 + $0xc8] sm:$0xff]
          %v831 = vld [vmem:[%s1 + $0xd0] sm:$0xff]
          %v832 = vld [vmem:[%s1 + $0xd8] sm:$0xff]
          %v833 = vld [vmem:[%s1 + $0xe0] sm:$0xff]
          %v834 = vld [vmem:[%s1 + $0xe8] sm:$0xff]
          %v835 = vld [vmem:[%s1 + $0xf0] sm:$0xff]
          %v836 = vld [vmem:[%s1 + $0xf8] sm:$0xff]
          %v839 = vunpack.c.l.s4 1983009808
          %v840 = vunpack.c.0.s8 %v839
          %v841 = vlaneseq
          %v842 = vshrl.u32 %v841, 7
          %v843 = vsub.s32 %v840, %v842
          %v844 = vrot.slane %v804, %v843
          %v845 = vcombine.high %v844, %v844
          %848 = vmatprep.subr.mxu0 0.0
          %849 = vmatpush1.msra.mxu0 %v820
          %850 = vmatprep.subr.mxu0 0.0
          %851 = vmatpush1.msra.mxu0 %v819
          %852 = vmatprep.subr.mxu0 0.0
          %853 = vmatpush1.msra.mxu0 %v818
          %854 = vmatprep.subr.mxu0 0.0
          %855 = vmatpush1.msra.mxu0 %v817
          %856 = vmatprep.subr.mxu0 0.0
          %857 = vmatpush1.msra.mxu0 %v816
          %858 = vmatprep.subr.mxu0 0.0
          %859 = vmatpush1.msra.mxu0 %v815
          %860 = vmatprep.subr.mxu0 0.0
          %861 = vmatpush1.msra.mxu0 %v814
          %862 = vmatprep.subr.mxu0 0.0
          %863 = vmatpush1.msra.mxu0 %v813
          %864 = vmatprep.subr.mxu0 0.0
          %865 = vmatpush1.msra.mxu0 %v812
          %866 = vmatprep.subr.mxu0 0.0
          %867 = vmatpush1.msra.mxu0 %v811
          %868 = vmatprep.subr.mxu0 0.0
          %869 = vmatpush1.msra.mxu0 %v810
          %870 = vmatprep.subr.mxu0 0.0
          %871 = vmatpush1.msra.mxu0 %v809
          %872 = vmatprep.subr.mxu0 0.0
          %873 = vmatpush1.msra.mxu0 %v808
          %874 = vmatprep.subr.mxu0 0.0
          %875 = vmatpush1.msra.mxu0 %v807
          %876 = vmatprep.subr.mxu0 0.0
          %877 = vmatpush1.msra.mxu0 %v806
          %878 = vmatprep.subr.mxu0 0.0
          %879 = vmatpush1.msra.mxu0 %v805
          %880 = vmatprep.subr.mxu0 0.0
          %881 = vmatpush2.msra.mxu0 %v836
          %882 = vmatprep.subr.mxu0 0.0
          %883 = vmatpush2.msra.mxu0 %v835
          %884 = vmatprep.subr.mxu0 0.0
          %885 = vmatpush2.msra.mxu0 %v834
          %886 = vmatprep.subr.mxu0 0.0
          %887 = vmatpush2.msra.mxu0 %v833
          %888 = vmatprep.subr.mxu0 0.0
          %889 = vmatpush2.msra.mxu0 %v832
          %890 = vmatprep.subr.mxu0 0.0
          %891 = vmatpush2.msra.mxu0 %v831
          %892 = vmatprep.subr.mxu0 0.0
          %893 = vmatpush2.msra.mxu0 %v830
          %894 = vmatprep.subr.mxu0 0.0
          %895 = vmatpush2.msra.mxu0 %v829
          %896 = vmatprep.subr.mxu0 0.0
          %897 = vmatpush2.msra.mxu0 %v828
          %898 = vmatprep.subr.mxu0 0.0
          %899 = vmatpush2.msra.mxu0 %v827
          %900 = vmatprep.subr.mxu0 0.0
          %901 = vmatpush2.msra.mxu0 %v826
          %902 = vmatprep.subr.mxu0 0.0
          %903 = vmatpush2.msra.mxu0 %v825
          %904 = vmatprep.subr.mxu0 0.0
          %905 = vmatpush2.msra.mxu0 %v824
          %906 = vmatprep.subr.mxu0 0.0
          %907 = vmatpush2.msra.mxu0 %v823
          %908 = vmatprep.subr.mxu0 0.0
          %909 = vmatpush2.msra.mxu0 %v822
          %910 = vmatprep.subr.mxu0 0.0
          %911 = vmatpush2.msra.mxu0 %v821
          %912 = vmatprep.mubr.f32.mxu0 %v845
          %913 = vmatmul.mubr.f32.gmra.mxu0 %v844
          %v914 = vpop.f32.mrf.mxu0
          %v915 = vadd.f32 0.0, %v914
          %v916 = vpop.f32.mrf.mxu0
          %917 = vdwg.mxu0
          %vm918 = vcmask 254976
          %919 = vst.msk [vmem:[#allocation4] sm:$0x3] %vm918, %v915
        $region74: #{_lambda_.3} parent=61 // pred_fallthru
          _
        // Predicated region
        $region75: #{_lambda_.3} parent=61 // pred_check
          %p920 = pneg %p74
        $region76: #{_lambda_.3} parent=61 // pred_check_branch
          %922 = sbr.rel (%p920) target = $region78
        $region77: #{_lambda_.3} parent=61 // pred_region
          %s924 = ssub.s32 32, 32
          %925 = vsyncadd [#allocation5], %s924
          %s927 = sshll.u32 [#allocation4], 4
          %s928 = int_to_ptr.vmem [resolvable:$true] %s927
          %930 = dma.vmem_to_hbm [thread:$0]  %s928, 32, %s2, [#allocation5]
        $region78: #{_lambda_.3} parent=61 // pred_fallthru
          _
        // Predicated region
        $region79: #{_lambda_.3} parent=61 // pred_check
          %p931 = pneg %p74
        $region80: #{_lambda_.3} parent=61 // pred_check_branch
          %933 = sbr.rel (%p931) target = $region82
        $region81: #{_lambda_.3} parent=61 // pred_region
          %934 = dma.done [#allocation5], 32
        $region82: #{_lambda_.3} parent=61 // pred_fallthru
          _
      $region62: #{_lambda_.3} parent=5 // pred_fallthru
        _
      %p935 = scmp.le.s32.totalorder 2, %s9
      // Predicated region
      $region83: #{_lambda_.3} parent=5 // pred_check
        %p936 = pneg %p935
      $region84: #{_lambda_.3} parent=5 // pred_check_branch
        %938 = sbr.rel (%p936) target = $region86
      $region85: #{_lambda_.3} parent=5 // pred_region
        %s939 = ssub.s32 %s9, 2
      $region86: #{_lambda_.3} parent=5 // pred_fallthru
        _
    $region6: #{_lambda_.3} parent=1 // loop_footer
      %s13 = sadd.s32 1, %s9
    $region7: #{_lambda_.3} parent=1 // loop_footer_branch
      %8 = sbr.rel target = $region3
    $region8: #{_lambda_.3} parent=1 // loop_exit
      _
    %940 = vsyncpa [#allocation5], 1
    %s941 = scalar_lea.sflag [#allocation5], 1
    %942 = vsyncpa %s941, 1

</llo_original>
